<compile_context>
chip_gen: v6e
topology: v6e:2x2x1
jax: 0.10.0
libtpu: 0.0.40
codegen_flags: <defaults>
</compile_context>

<pallas_src>
import math

import jax
import jax.numpy as jnp
from jax.experimental import pallas as pl
from jax.experimental.pallas import tpu as pltpu

NUM_GROUPS = 32
EPS = 1e-5

# Tile targets.  256/512 fill the 256x256 MXU on v6e/v7x; v5e (4x128^2 MXU)
# is happy with 128-multiples too.  _pick_tile clamps them to the real extent.
TS_TARGET = 512   # spatial tile for the GroupNorm + QKV projection kernel
TQ_TARGET = 256   # query tile for flash attention
TK_TARGET = 512   # key/value tile for flash attention


def _pick_tile(extent, target):
    """Largest t <= target that divides `extent` and is 8-aligned (or == extent)."""
    for t in range(min(target, extent), 0, -1):
        if extent % t == 0 and (t % 8 == 0 or t == extent):
            return t
    return extent


def _vmem_limit_bytes():
    try:
        cap = pltpu.get_tpu_info().vmem_capacity_bytes
    except Exception:
        cap = 64 * 1024 * 1024
    # leave headroom below physical capacity (v5e/v6e: 128 MiB, v7x: 64 MiB)
    return int(min(cap * 3 // 4, 100 * 1024 * 1024))


# --------------------------------------------------------------------------
# Kernel 1: fused GroupNorm (pre-folded affine) + QKV projection
# --------------------------------------------------------------------------
def _gn_qkv_kernel(x_ref, a_ref, b_ref, wqkv_ref, bqkv_ref,
                   q_ref, k_ref, v_ref):
    x = x_ref[0]                               # (TS, C) f32 (pre-norm residual input)
    xn = x * a_ref[0] + b_ref[0]               # GroupNorm as per-channel affine, f32
    qkv = jnp.dot(xn.astype(jnp.bfloat16), wqkv_ref[...],
                  preferred_element_type=jnp.float32) + bqkv_ref[...]   # (TS, 3C) f32
    c = x.shape[1]
    q_ref[0] = qkv[:, :c].astype(jnp.bfloat16)          # 1/sqrt(C) already folded in
    k_ref[0] = qkv[:, c:2 * c].astype(jnp.bfloat16)
    v_ref[0] = qkv[:, 2 * c:].astype(jnp.bfloat16)


# --------------------------------------------------------------------------
# Kernel 2: flash attention (online softmax) + output projection + residual
# --------------------------------------------------------------------------
def _flash_attn_kernel(q_ref, k_ref, v_ref, xres_ref, wo_ref, bo_ref,
                       o_ref, m_sc, l_sc, acc_sc):
    kv = pl.program_id(2)

    @pl.when(kv == 0)
    def _():
        m_sc[...] = jnp.full_like(m_sc, -jnp.inf)
        l_sc[...] = jnp.zeros_like(l_sc)
        acc_sc[...] = jnp.zeros_like(acc_sc)

    q = q_ref[0]                                              # (TQ, C) bf16, pre-scaled
    k = k_ref[0]                                              # (TK, C) bf16
    s = jnp.dot(q, k.T, preferred_element_type=jnp.float32)   # (TQ, TK) f32

    m_prev = m_sc[...]
    m_new = jnp.maximum(m_prev, jnp.max(s, axis=-1, keepdims=True))
    alpha = jnp.exp(m_prev - m_new)                           # f32
    p = jnp.exp(s - m_new)                                    # f32
    l_sc[...] = alpha * l_sc[...] + jnp.sum(p, axis=-1, keepdims=True)
    acc_sc[...] = alpha * acc_sc[...] + jnp.dot(
        p.astype(jnp.bfloat16), v_ref[0], preferred_element_type=jnp.float32)
    m_sc[...] = m_new

    @pl.when(kv == pl.num_programs(2) - 1)
    def _():
        attn = acc_sc[...] * pl.reciprocal(l_sc[...], approx=True)      # (TQ, C) f32
        out = jnp.dot(attn.astype(jnp.bfloat16), wo_ref[...],
                      preferred_element_type=jnp.float32) + bo_ref[...]
        o_ref[0] = (out + xres_ref[0]).astype(o_ref.dtype)              # residual, f32


# --------------------------------------------------------------------------
# Wrapper
# --------------------------------------------------------------------------
def vae_attention_block(x_nchw, params):
    """x_nchw: (N, C, H, W) float32.  Returns (N, C, H, W) float32."""
    n, c, h, w = x_nchw.shape
    hw = h * w
    assert c % NUM_GROUPS == 0, "GroupNorm(32) requires C % 32 == 0"
    cg = c // NUM_GROUPS
    x_f32 = x_nchw.astype(jnp.float32)

    # glue: NCHW -> (N, HW, C), channels-last (lane-dense when C % 128 == 0)
    x_seq = jnp.transpose(x_f32.reshape(n, c, hw), (0, 2, 1))

    # GroupNorm statistics folded to a per-image per-channel affine: xn = x*a + b.
    # TODO(synk): these two tiny per-(image, group) reductions are plain JAX; all
    # heavy compute (normalize, QKV, attention, out-proj, residual) is in Pallas.
    xg = x_f32.reshape(n, NUM_GROUPS, cg * hw)
    mean_g = jnp.mean(xg, axis=-1)                                     # (N, G)
    var_g = jnp.mean(jnp.square(xg - mean_g[..., None]), axis=-1)      # centered var
    inv_std_g = jax.lax.rsqrt(var_g + EPS)
    mean_c = jnp.repeat(mean_g, cg, axis=1)                            # (N, C)
    inv_std_c = jnp.repeat(inv_std_g, cg, axis=1)                      # (N, C)
    gamma = params["gamma"].reshape(1, c).astype(jnp.float32)
    beta = params["beta"].reshape(1, c).astype(jnp.float32)
    a_aff = (gamma * inv_std_c).reshape(n, 1, c)
    b_aff = (beta - mean_c * gamma * inv_std_c).reshape(n, 1, c)

    # Pack QKV weights; fold the 1/sqrt(C) softmax scale into Wq / bq (1 head).
    scale = 1.0 / math.sqrt(c)
    w_qkv = jnp.concatenate(
        [params["wq"] * scale, params["wk"], params["wv"]], axis=1
    ).astype(jnp.bfloat16)                                             # (C, 3C)
    b_qkv = jnp.concatenate(
        [params["bq"] * scale, params["bk"], params["bv"]]
    ).reshape(1, 3 * c).astype(jnp.float32)
    wo = params["wo"].astype(jnp.bfloat16)                             # (C, C)
    bo = params["bo"].reshape(1, c).astype(jnp.float32)

    vmem_limit = _vmem_limit_bytes()

    # ---- kernel 1: GroupNorm + fused QKV projection, tiled over HW ----------
    ts = _pick_tile(hw, TS_TARGET)
    qkv_cost = pl.CostEstimate(
        flops=int(2 * n * hw * c * 3 * c),
        transcendentals=0,
        bytes_accessed=int(n * hw * c * 4 + 3 * n * hw * c * 2 + 3 * c * c * 2))
    q_b, k_b, v_b = pl.pallas_call(
        _gn_qkv_kernel,
        out_shape=(jax.ShapeDtypeStruct((n, hw, c), jnp.bfloat16),
                   jax.ShapeDtypeStruct((n, hw, c), jnp.bfloat16),
                   jax.ShapeDtypeStruct((n, hw, c), jnp.bfloat16)),
        grid=(n, hw // ts),
        in_specs=[
            pl.BlockSpec((1, ts, c), lambda i, s: (i, s, 0)),      # x tile
            pl.BlockSpec((1, 1, c), lambda i, s: (i, 0, 0)),       # affine scale a
            pl.BlockSpec((1, 1, c), lambda i, s: (i, 0, 0)),       # affine shift b
            pl.BlockSpec((c, 3 * c), lambda i, s: (0, 0)),         # packed W_qkv
            pl.BlockSpec((1, 3 * c), lambda i, s: (0, 0)),         # packed b_qkv
        ],
        out_specs=(
            pl.BlockSpec((1, ts, c), lambda i, s: (i, s, 0)),
            pl.BlockSpec((1, ts, c), lambda i, s: (i, s, 0)),
            pl.BlockSpec((1, ts, c), lambda i, s: (i, s, 0)),
        ),
        compiler_params=pltpu.CompilerParams(
            dimension_semantics=("parallel", "parallel"),
            vmem_limit_bytes=vmem_limit),
        cost_estimate=qkv_cost,
    )(x_seq, a_aff, b_aff, w_qkv, b_qkv)

    # ---- kernel 2: flash attention + output projection + residual -----------
    tq = _pick_tile(hw, TQ_TARGET)
    tk = _pick_tile(hw, TK_TARGET)
    attn_cost = pl.CostEstimate(
        flops=int(n * (4 * hw * hw * c + 2 * hw * c * c)),
        transcendentals=int(n * hw * hw),
        bytes_accessed=int(n * (3 * hw * c * 2 + 2 * hw * c * 4) + c * c * 2))
    out_seq = pl.pallas_call(
        _flash_attn_kernel,
        out_shape=jax.ShapeDtypeStruct((n, hw, c), jnp.float32),
        grid=(n, hw // tq, hw // tk),
        in_specs=[
            pl.BlockSpec((1, tq, c), lambda i, qi, ki: (i, qi, 0)),   # q tile
            pl.BlockSpec((1, tk, c), lambda i, qi, ki: (i, ki, 0)),   # k tile
            pl.BlockSpec((1, tk, c), lambda i, qi, ki: (i, ki, 0)),   # v tile
            pl.BlockSpec((1, tq, c), lambda i, qi, ki: (i, qi, 0)),   # residual x
            pl.BlockSpec((c, c), lambda i, qi, ki: (0, 0)),           # W_o
            pl.BlockSpec((1, c), lambda i, qi, ki: (0, 0)),           # b_o
        ],
        out_specs=pl.BlockSpec((1, tq, c), lambda i, qi, ki: (i, qi, 0)),
        scratch_shapes=[
            pltpu.VMEM((tq, 1), jnp.float32),      # running max m
            pltpu.VMEM((tq, 1), jnp.float32),      # running denom l
            pltpu.VMEM((tq, c), jnp.float32),      # running numerator acc
        ],
        compiler_params=pltpu.CompilerParams(
            dimension_semantics=("parallel", "parallel", "arbitrary"),
            vmem_limit_bytes=vmem_limit),
        cost_estimate=attn_cost,
    )(q_b, k_b, v_b, x_seq, wo, bo)

    # glue: (N, HW, C) -> NCHW
    return jnp.transpose(out_seq, (0, 2, 1)).reshape(n, c, h, w)


# --------------------------------------------------------------------------
# Pure-JAX reference (matches the PyTorch module semantics, all f32)
# --------------------------------------------------------------------------
def ref_forward(x, params):
    n, c, h, w = x.shape
    hw = h * w
    cg = c // NUM_GROUPS
    xg = x.reshape(n, NUM_GROUPS, cg, hw)
    mean = jnp.mean(xg, axis=(2, 3), keepdims=True)
    var = jnp.mean((xg - mean) ** 2, axis=(2, 3), keepdims=True)
    xn = (xg - mean) / jnp.sqrt(var + EPS)
    xn = xn.reshape(n, c, hw)
    xn = xn * params["gamma"][None, :, None] + params["beta"][None, :, None]
    seq = jnp.transpose(xn, (0, 2, 1))                                 # (N, HW, C)
    q = seq @ params["wq"] + params["bq"]
    k = seq @ params["wk"] + params["bk"]
    v = seq @ params["wv"] + params["bv"]
    scores = (q @ jnp.transpose(k, (0, 2, 1))) / math.sqrt(c)
    p = jax.nn.softmax(scores, axis=-1)
    out = p @ v @ params["wo"] + params["bo"]
    out = jnp.transpose(out, (0, 2, 1)).reshape(n, c, h, w)
    return out + x


def init_params(key, c):
    ks = jax.random.split(key, 8)
    s = 0.02
    return {
        "gamma": jnp.ones((c,), jnp.float32),
        "beta": jnp.zeros((c,), jnp.float32),
        "wq": s * jax.random.normal(ks[0], (c, c), jnp.float32),
        "wk": s * jax.random.normal(ks[1], (c, c), jnp.float32),
        "wv": s * jax.random.normal(ks[2], (c, c), jnp.float32),
        "bq": s * jax.random.normal(ks[3], (c,), jnp.float32),
        "bk": s * jax.random.normal(ks[4], (c,), jnp.float32),
        "bv": s * jax.random.normal(ks[5], (c,), jnp.float32),
        "wo": s * jax.random.normal(ks[6], (c, c), jnp.float32),
        "bo": s * jax.random.normal(ks[7], (c,), jnp.float32),
    }


if __name__ == "__main__":
    # C must be a multiple of 32 (GroupNorm) and is chosen lane-dense (128);
    # HW = 1024 exercises multiple q-tiles and multiple online-softmax kv steps.
    N, C, H, W = 2, 128, 32, 32
    key = jax.random.PRNGKey(0)
    kx, kp = jax.random.split(key)
    x = jax.random.normal(kx, (N, C, H, W), jnp.float32)
    params = init_params(kp, C)

    out = jax.block_until_ready(vae_attention_block(x, params))

    ref = ref_forward(x, params)
    assert out.shape == (N, C, H, W)
    max_err = float(jnp.max(jnp.abs(out - ref)))
    # bf16 matmul operands with f32 accumulation: error vs the f32 reference
    # is ~1e-3 at these magnitudes.
    assert jnp.allclose(out, ref, atol=1e-2, rtol=1e-2), max_err

    print("KERNEL_OK")
</pallas_src>

<mosaic_0001>
module attributes {stable_mosaic.version = 11 : i64} {
  func.func @_gn_qkv_kernel(%arg0: i32, %arg1: i32, %arg2: memref<1x512x128xf32, #tpu.memory_space<vmem>>, %arg3: memref<1x1x128xf32, #tpu.memory_space<vmem>>, %arg4: memref<1x1x128xf32, #tpu.memory_space<vmem>>, %arg5: memref<128x384xbf16, #tpu.memory_space<vmem>>, %arg6: memref<1x384xf32, #tpu.memory_space<vmem>>, %arg7: memref<1x512x128xbf16, #tpu.memory_space<vmem>>, %arg8: memref<1x512x128xbf16, #tpu.memory_space<vmem>>, %arg9: memref<1x512x128xbf16, #tpu.memory_space<vmem>>) attributes {dimension_semantics = [#tpu.dimension_semantics<parallel>, #tpu.dimension_semantics<parallel>], iteration_bounds = array<i64: 2, 2>, scalar_prefetch = 0 : i64, scratch_operands = 0 : i64, tpu.core_type = #tpu.core_type<tc>, window_params = [{transform_indices = @transform_0, window_bounds = array<i64: 1, 512, 128>}, {transform_indices = @transform_1, window_bounds = array<i64: 1, 1, 128>}, {transform_indices = @transform_2, window_bounds = array<i64: 1, 1, 128>}, {pipeline_mode = #tpu.pipeline_mode<synchronous>, transform_indices = @transform_3, window_bounds = array<i64: 128, 384>}, {pipeline_mode = #tpu.pipeline_mode<synchronous>, transform_indices = @transform_4, window_bounds = array<i64: 1, 384>}, {transform_indices = @transform_5, window_bounds = array<i64: 1, 512, 128>}, {transform_indices = @transform_6, window_bounds = array<i64: 1, 512, 128>}, {transform_indices = @transform_7, window_bounds = array<i64: 1, 512, 128>}]} {
    %c0 = arith.constant 0 : index
    %c0_0 = arith.constant 0 : index
    %c0_1 = arith.constant 0 : index
    %0 = vector.load %arg2[%c0, %c0_0, %c0_1] : memref<1x512x128xf32, #tpu.memory_space<vmem>>, vector<1x512x128xf32>
    %1 = vector.shape_cast %0 : vector<1x512x128xf32> to vector<512x128xf32>
    %c0_2 = arith.constant 0 : index
    %c0_3 = arith.constant 0 : index
    %c0_4 = arith.constant 0 : index
    %2 = vector.load %arg3[%c0_2, %c0_3, %c0_4] : memref<1x1x128xf32, #tpu.memory_space<vmem>>, vector<1x1x128xf32>
    %3 = vector.shape_cast %2 : vector<1x1x128xf32> to vector<1x128xf32>
    %4 = vector.broadcast %3 : vector<1x128xf32> to vector<512x128xf32>
    %5 = arith.mulf %1, %4 : vector<512x128xf32>
    %c0_5 = arith.constant 0 : index
    %c0_6 = arith.constant 0 : index
    %c0_7 = arith.constant 0 : index
    %6 = vector.load %arg4[%c0_5, %c0_6, %c0_7] : memref<1x1x128xf32, #tpu.memory_space<vmem>>, vector<1x1x128xf32>
    %7 = vector.shape_cast %6 : vector<1x1x128xf32> to vector<1x128xf32>
    %8 = vector.broadcast %7 : vector<1x128xf32> to vector<512x128xf32>
    %9 = arith.addf %5, %8 : vector<512x128xf32>
    %10 = arith.truncf %9 : vector<512x128xf32> to vector<512x128xbf16>
    %c0_8 = arith.constant 0 : index
    %c0_9 = arith.constant 0 : index
    %11 = vector.load %arg5[%c0_8, %c0_9] : memref<128x384xbf16, #tpu.memory_space<vmem>>, vector<128x384xbf16>
    %cst = arith.constant dense<0.000000e+00> : vector<512x384xf32>
    %12 = tpu.matmul %10, %11, %cst {dimension_numbers = #tpu.dot_dimension_numbers<[1], [0], [0], [1], [0, 0, 1, 1], [], []>} : vector<512x128xbf16>, vector<128x384xbf16>, vector<512x384xf32> -> vector<512x384xf32>
    %c0_10 = arith.constant 0 : index
    %c0_11 = arith.constant 0 : index
    %13 = vector.load %arg6[%c0_10, %c0_11] : memref<1x384xf32, #tpu.memory_space<vmem>>, vector<1x384xf32>
    %14 = vector.broadcast %13 : vector<1x384xf32> to vector<512x384xf32>
    %15 = arith.addf %12, %14 : vector<512x384xf32>
    %16 = vector.extract_strided_slice %15 {offsets = [0, 0], sizes = [512, 128], strides = [1, 1]} : vector<512x384xf32> to vector<512x128xf32>
    %17 = arith.truncf %16 : vector<512x128xf32> to vector<512x128xbf16>
    %c0_12 = arith.constant 0 : index
    %c0_13 = arith.constant 0 : index
    %c0_14 = arith.constant 0 : index
    %18 = vector.load %arg7[%c0_12, %c0_13, %c0_14] : memref<1x512x128xbf16, #tpu.memory_space<vmem>>, vector<1x512x128xbf16>
    %19 = vector.shape_cast %18 : vector<1x512x128xbf16> to vector<512x128xbf16>
    %20 = vector.shape_cast %17 : vector<512x128xbf16> to vector<1x512x128xbf16>
    tpu.vector_store %arg7[%c0_12, %c0_13, %c0_14], %20 {strides = array<i32>} : memref<1x512x128xbf16, #tpu.memory_space<vmem>>, vector<1x512x128xbf16>,
    %21 = vector.extract_strided_slice %15 {offsets = [0, 128], sizes = [512, 128], strides = [1, 1]} : vector<512x384xf32> to vector<512x128xf32>
    %22 = arith.truncf %21 : vector<512x128xf32> to vector<512x128xbf16>
    %c0_15 = arith.constant 0 : index
    %c0_16 = arith.constant 0 : index
    %c0_17 = arith.constant 0 : index
    %23 = vector.load %arg8[%c0_15, %c0_16, %c0_17] : memref<1x512x128xbf16, #tpu.memory_space<vmem>>, vector<1x512x128xbf16>
    %24 = vector.shape_cast %23 : vector<1x512x128xbf16> to vector<512x128xbf16>
    %25 = vector.shape_cast %22 : vector<512x128xbf16> to vector<1x512x128xbf16>
    tpu.vector_store %arg8[%c0_15, %c0_16, %c0_17], %25 {strides = array<i32>} : memref<1x512x128xbf16, #tpu.memory_space<vmem>>, vector<1x512x128xbf16>,
    %26 = vector.extract_strided_slice %15 {offsets = [0, 256], sizes = [512, 128], strides = [1, 1]} : vector<512x384xf32> to vector<512x128xf32>
    %27 = arith.truncf %26 : vector<512x128xf32> to vector<512x128xbf16>
    %c0_18 = arith.constant 0 : index
    %c0_19 = arith.constant 0 : index
    %c0_20 = arith.constant 0 : index
    %28 = vector.load %arg9[%c0_18, %c0_19, %c0_20] : memref<1x512x128xbf16, #tpu.memory_space<vmem>>, vector<1x512x128xbf16>
    %29 = vector.shape_cast %28 : vector<1x512x128xbf16> to vector<512x128xbf16>
    %30 = vector.shape_cast %27 : vector<512x128xbf16> to vector<1x512x128xbf16>
    tpu.vector_store %arg9[%c0_18, %c0_19, %c0_20], %30 {strides = array<i32>} : memref<1x512x128xbf16, #tpu.memory_space<vmem>>, vector<1x512x128xbf16>,
    return
  }
  func.func @transform_0(%arg0: i32, %arg1: i32) -> (i32, i32, i32) {
    %c0_i32 = arith.constant 0 : i32
    %c0_i32_0 = arith.constant 0 : i32
    return %arg0, %arg1, %c0_i32 : i32, i32, i32
  }
  func.func @transform_1(%arg0: i32, %arg1: i32) -> (i32, i32, i32) {
    %c0_i32 = arith.constant 0 : i32
    %c0_i32_0 = arith.constant 0 : i32
    %c0_i32_1 = arith.constant 0 : i32
    return %arg0, %c0_i32, %c0_i32_0 : i32, i32, i32
  }
  func.func @transform_2(%arg0: i32, %arg1: i32) -> (i32, i32, i32) {
    %c0_i32 = arith.constant 0 : i32
    %c0_i32_0 = arith.constant 0 : i32
    %c0_i32_1 = arith.constant 0 : i32
    return %arg0, %c0_i32, %c0_i32_0 : i32, i32, i32
  }
  func.func @transform_3(%arg0: i32, %arg1: i32) -> (i32, i32) {
    %c0_i32 = arith.constant 0 : i32
    %c0_i32_0 = arith.constant 0 : i32
    %c0_i32_1 = arith.constant 0 : i32
    return %c0_i32, %c0_i32_0 : i32, i32
  }
  func.func @transform_4(%arg0: i32, %arg1: i32) -> (i32, i32) {
    %c0_i32 = arith.constant 0 : i32
    %c0_i32_0 = arith.constant 0 : i32
    %c0_i32_1 = arith.constant 0 : i32
    return %c0_i32, %c0_i32_0 : i32, i32
  }
  func.func @transform_5(%arg0: i32, %arg1: i32) -> (i32, i32, i32) {
    %c0_i32 = arith.constant 0 : i32
    %c0_i32_0 = arith.constant 0 : i32
    return %arg0, %arg1, %c0_i32 : i32, i32, i32
  }
  func.func @transform_6(%arg0: i32, %arg1: i32) -> (i32, i32, i32) {
    %c0_i32 = arith.constant 0 : i32
    %c0_i32_0 = arith.constant 0 : i32
    return %arg0, %arg1, %c0_i32 : i32, i32, i32
  }
  func.func @transform_7(%arg0: i32, %arg1: i32) -> (i32, i32, i32) {
    %c0_i32 = arith.constant 0 : i32
    %c0_i32_0 = arith.constant 0 : i32
    return %arg0, %arg1, %c0_i32 : i32, i32, i32
  }
}

</mosaic_0001>

<llo_original>
// kernel: tpu_custom_call.1
$region0: #{tpu_custom_call.1}
  #allocation0 [shape = 'u32[]', space=smem, size = 0x4, offset = 0x4, fixed_abs, tag = 'smem constant byte address 0x4 - core index']
  #allocation1 [shape = 'u32[144,128]{1,0:T(1,128)}', space=vmem, size = 0x12000, scoped, tag = 'internal scratch']
  %s0 = inlined_call_operand.hbm [shape: f32[2,1024,128], index: 0, kind: input, shape index: {}]
  %s1 = inlined_call_operand.hbm [shape: f32[2,1,128], index: 1, kind: input, shape index: {}]
  %s2 = inlined_call_operand.vmem [shape: f32[2,1,128], index: 2, kind: input, shape index: {}]
  %s3 = inlined_call_operand.hbm [shape: bf16[128,384], index: 3, kind: input, shape index: {}]
  %s4 = inlined_call_operand.vmem [shape: f32[1,384], index: 4, kind: input, shape index: {}]
  %s5 = inlined_call_operand.hbm [shape: bf16[2,1024,128], index: 5, kind: output, shape index: {0}]
  %s6 = inlined_call_operand.hbm [shape: bf16[2,1024,128], index: 6, kind: output, shape index: {1}]
  %s7 = inlined_call_operand.hbm [shape: bf16[2,1024,128], index: 7, kind: output, shape index: {2}]
  %8 = xla_tuple %s5, %s6, %s7
  %s9 = sld [smem:[#allocation0]]
  $region81: #{tpu_custom_call.1} parent=0
    _
  %s11 = ssub.s32 1, %s9
  %s12 = scalar_select 0, %s11, %s9
  $region1: #{tpu_custom_call.1} parent=0
    #allocation2 [shape = 'u8[524288]{0}', space=vmem, size = 0x80000, scoped, tag = 'input window, operand 0']
    #allocation3 [shape = 's32[2]{0}', space=sflag, size = 0x8, scoped, tag = 'scoped memory for tpu_custom_call.1']
    #allocation4 [shape = 's32[2]{0}', space=sflag, size = 0x8, scoped, tag = 'scoped memory for tpu_custom_call.1']
    #allocation5 [shape = 'u8[1024]{0}', space=vmem, size = 0x400, scoped, tag = 'input window, operand 1']
    #allocation6 [shape = 's32[2]{0}', space=sflag, size = 0x8, scoped, tag = 'scoped memory for tpu_custom_call.1']
    #allocation7 [shape = 'u8[98304]{0}', space=vmem, size = 0x18000, scoped, tag = 'input window, operand 3, single buffered']
    #allocation8 [shape = 'u8[262144]{0}', space=vmem, size = 0x40000, scoped, tag = 'output window, operand 0']
    #allocation9 [shape = 'u8[262144]{0}', space=vmem, size = 0x40000, scoped, tag = 'output window, operand 1']
    #allocation10 [shape = 's32[2]{0}', space=sflag, size = 0x8, scoped, tag = 'scoped memory for tpu_custom_call.1']
    #allocation11 [shape = 'u8[262144]{0}', space=vmem, size = 0x40000, scoped, tag = 'output window, operand 2']
    %13 = vsyncpa [#allocation3], 0
    %s14 = scalar_lea.sflag [#allocation3], 1
    %15 = vsyncpa %s14, 0
    %16 = vsyncpa [#allocation6], 0
    %s17 = scalar_lea.sflag [#allocation6], 1
    %18 = vsyncpa %s17, 0
    %19 = vsyncpa [#allocation4], 0
    %s20 = scalar_lea.sflag [#allocation4], 1
    %21 = vsyncpa %s20, 0
    %22 = vsyncpa [#allocation10], 0
    %s23 = scalar_lea.sflag [#allocation10], 1
    %24 = vsyncpa %s23, 0
    loop: start=0, step=1, limit=6
    $region2: #{tpu_custom_call.1} parent=1 // loop_pre_header
      _
    $region3: #{tpu_custom_call.1} parent=1 // loop_header
      %s26 = sphi 0, %s30
      %p27 = scmp.ge.s32.totalorder %s26, 6
      %s33 = sphi 0, %s45
      %s34 = sphi 0, %s41
      %s35 = sphi 0, %s33
      %s36 = sphi 0, %s34
      %s37 = sphi 0, %s35
      %s38 = sphi 0, %s36
      %s50 = sphi 0, %s52
      %s53 = sphi 0, %s50
      %s54 = sphi 0, %s53
      %s70 = sphi 0, %s54
      %s76 = sphi 0, %s78
      %s79 = sphi 0, %s76
      %s80 = sphi 0, %s79
      %s96 = sphi 0, %s80
      %s102 = sphi 0, %s104
      %s105 = sphi 0, %s102
      %s106 = sphi 0, %s105
      %s122 = sphi 0, %s106
      %s126 = sphi 0, %s126
      %s128 = sphi 0, %s126
      %s129 = sphi 0, %s128
      %s143 = sphi 0, %s129
      %s147 = sphi 0, %s147
      %s149 = sphi 0, %s147
      %s150 = sphi 0, %s149
      %s164 = sphi 0, %s150
      %s172 = sphi 0, %s174
      %s175 = sphi 0, %s172
      %s176 = sphi 0, %s175
      %s192 = sphi 0, %s176
      %s200 = sphi 0, %s202
      %s203 = sphi 0, %s200
      %s204 = sphi 0, %s203
      %s220 = sphi 0, %s204
      %s228 = sphi 0, %s230
      %s231 = sphi 0, %s228
      %s232 = sphi 0, %s231
      %s248 = sphi 0, %s232
    $region4: #{tpu_custom_call.1} parent=1 // loop_header_branch
      %29 = sbr.rel (%p27) target = $region8
    $region5: #{tpu_custom_call.1} parent=1 // loop_body
      %s31 = ssub.s32 %s26, 1
      %s32 = ssub.s32 %s26, 2
      %s39 = sadd.s32 1, %s34
      %p40 = scmp.ge.s32.totalorder %s39, 2
      %s41 = scalar_select %p40, 0, %s39
      %s42 = sadd.s32 1, %s33
      %s43 = scalar_select %p40, %s42, %s33
      %p44 = scmp.ge.s32.totalorder %s43, 2
      %s45 = scalar_select %p44, 0, %s43
      %s46 = ssub.s32 %s33, %s45
      %s47 = ssub.s32 %s34, %s41
      %s48 = sor.u32 %s46, %s47
      %p49 = scmp.eq.s32.totalorder %s48, 0
      %s51 = sadd.s32 %s50, 1
      %s52 = scalar_select %p49, %s50, %s51
      %p55 = pneg %p49
      %p56 = scmp.eq.s32.totalorder %s26, 3
      %p57 = por %p55, %p56
      %p58 = scmp.ne.s32.totalorder %s50, %s53
      %p59 = scmp.eq.s32.totalorder %s26, 0
      %p60 = por %p58, %p59
      %p61 = scmp.ne.s32.totalorder %s50, %s53
      %p62 = scmp.eq.s32.totalorder %s31, 3
      %p63 = por %p61, %p62
      %p64 = scmp.ne.s32.totalorder %s53, %s54
      %p65 = scmp.eq.s32.totalorder %s31, 0
      %p66 = por %p64, %p65
      %p67 = scmp.ne.s32.totalorder %s53, %s54
      %p68 = scmp.eq.s32.totalorder %s32, 3
      %p69 = por %p67, %p68
      %p71 = scmp.ne.s32.totalorder %s54, %s70
      %p72 = scmp.eq.s32.totalorder %s32, 0
      %p73 = por %p71, %p72
      %s74 = ssub.s32 %s33, %s45
      %p75 = scmp.eq.s32.totalorder %s74, 0
      %s77 = sadd.s32 %s76, 1
      %s78 = scalar_select %p75, %s76, %s77
      %p81 = pneg %p75
      %p82 = scmp.eq.s32.totalorder %s26, 3
      %p83 = por %p81, %p82
      %p84 = scmp.ne.s32.totalorder %s76, %s79
      %p85 = scmp.eq.s32.totalorder %s26, 0
      %p86 = por %p84, %p85
      %p87 = scmp.ne.s32.totalorder %s76, %s79
      %p88 = scmp.eq.s32.totalorder %s31, 3
      %p89 = por %p87, %p88
      %p90 = scmp.ne.s32.totalorder %s79, %s80
      %p91 = scmp.eq.s32.totalorder %s31, 0
      %p92 = por %p90, %p91
      %p93 = scmp.ne.s32.totalorder %s79, %s80
      %p94 = scmp.eq.s32.totalorder %s32, 3
      %p95 = por %p93, %p94
      %p97 = scmp.ne.s32.totalorder %s80, %s96
      %p98 = scmp.eq.s32.totalorder %s32, 0
      %p99 = por %p97, %p98
      %s100 = ssub.s32 %s33, %s45
      %p101 = scmp.eq.s32.totalorder %s100, 0
      %s103 = sadd.s32 %s102, 1
      %s104 = scalar_select %p101, %s102, %s103
      %p107 = pneg %p101
      %p108 = scmp.eq.s32.totalorder %s26, 3
      %p109 = por %p107, %p108
      %p110 = scmp.ne.s32.totalorder %s102, %s105
      %p111 = scmp.eq.s32.totalorder %s26, 0
      %p112 = por %p110, %p111
      %p113 = scmp.ne.s32.totalorder %s102, %s105
      %p114 = scmp.eq.s32.totalorder %s31, 3
      %p115 = por %p113, %p114
      %p116 = scmp.ne.s32.totalorder %s105, %s106
      %p117 = scmp.eq.s32.totalorder %s31, 0
      %p118 = por %p116, %p117
      %p119 = scmp.ne.s32.totalorder %s105, %s106
      %p120 = scmp.eq.s32.totalorder %s32, 3
      %p121 = por %p119, %p120
      %p123 = scmp.ne.s32.totalorder %s106, %s122
      %p124 = scmp.eq.s32.totalorder %s32, 0
      %p125 = por %p123, %p124
      %s127 = sadd.s32 %s126, 1
      %p130 = scmp.eq.s32.totalorder %s26, 3
      %p131 = scmp.ne.s32.totalorder %s126, %s128
      %p132 = scmp.eq.s32.totalorder %s26, 0
      %p133 = por %p131, %p132
      %p134 = scmp.ne.s32.totalorder %s126, %s128
      %p135 = scmp.eq.s32.totalorder %s31, 3
      %p136 = por %p134, %p135
      %p137 = scmp.ne.s32.totalorder %s128, %s129
      %p138 = scmp.eq.s32.totalorder %s31, 0
      %p139 = por %p137, %p138
      %p140 = scmp.ne.s32.totalorder %s128, %s129
      %p141 = scmp.eq.s32.totalorder %s32, 3
      %p142 = por %p140, %p141
      %p144 = scmp.ne.s32.totalorder %s129, %s143
      %p145 = scmp.eq.s32.totalorder %s32, 0
      %p146 = por %p144, %p145
      %s148 = sadd.s32 %s147, 1
      %p151 = scmp.eq.s32.totalorder %s26, 3
      %p152 = scmp.ne.s32.totalorder %s147, %s149
      %p153 = scmp.eq.s32.totalorder %s26, 0
      %p154 = por %p152, %p153
      %p155 = scmp.ne.s32.totalorder %s147, %s149
      %p156 = scmp.eq.s32.totalorder %s31, 3
      %p157 = por %p155, %p156
      %p158 = scmp.ne.s32.totalorder %s149, %s150
      %p159 = scmp.eq.s32.totalorder %s31, 0
      %p160 = por %p158, %p159
      %p161 = scmp.ne.s32.totalorder %s149, %s150
      %p162 = scmp.eq.s32.totalorder %s32, 3
      %p163 = por %p161, %p162
      %p165 = scmp.ne.s32.totalorder %s150, %s164
      %p166 = scmp.eq.s32.totalorder %s32, 0
      %p167 = por %p165, %p166
      %s168 = ssub.s32 %s33, %s45
      %s169 = ssub.s32 %s34, %s41
      %s170 = sor.u32 %s168, %s169
      %p171 = scmp.eq.s32.totalorder %s170, 0
      %s173 = sadd.s32 %s172, 1
      %s174 = scalar_select %p171, %s172, %s173
      %p177 = pneg %p171
      %p178 = scmp.eq.s32.totalorder %s26, 3
      %p179 = por %p177, %p178
      %p180 = scmp.ne.s32.totalorder %s172, %s175
      %p181 = scmp.eq.s32.totalorder %s26, 0
      %p182 = por %p180, %p181
      %p183 = scmp.ne.s32.totalorder %s172, %s175
      %p184 = scmp.eq.s32.totalorder %s31, 3
      %p185 = por %p183, %p184
      %p186 = scmp.ne.s32.totalorder %s175, %s176
      %p187 = scmp.eq.s32.totalorder %s31, 0
      %p188 = por %p186, %p187
      %p189 = scmp.ne.s32.totalorder %s175, %s176
      %p190 = scmp.eq.s32.totalorder %s32, 3
      %p191 = por %p189, %p190
      %p193 = scmp.ne.s32.totalorder %s176, %s192
      %p194 = scmp.eq.s32.totalorder %s32, 0
      %p195 = por %p193, %p194
      %s196 = ssub.s32 %s33, %s45
      %s197 = ssub.s32 %s34, %s41
      %s198 = sor.u32 %s196, %s197
      %p199 = scmp.eq.s32.totalorder %s198, 0
      %s201 = sadd.s32 %s200, 1
      %s202 = scalar_select %p199, %s200, %s201
      %p205 = pneg %p199
      %p206 = scmp.eq.s32.totalorder %s26, 3
      %p207 = por %p205, %p206
      %p208 = scmp.ne.s32.totalorder %s200, %s203
      %p209 = scmp.eq.s32.totalorder %s26, 0
      %p210 = por %p208, %p209
      %p211 = scmp.ne.s32.totalorder %s200, %s203
      %p212 = scmp.eq.s32.totalorder %s31, 3
      %p213 = por %p211, %p212
      %p214 = scmp.ne.s32.totalorder %s203, %s204
      %p215 = scmp.eq.s32.totalorder %s31, 0
      %p216 = por %p214, %p215
      %p217 = scmp.ne.s32.totalorder %s203, %s204
      %p218 = scmp.eq.s32.totalorder %s32, 3
      %p219 = por %p217, %p218
      %p221 = scmp.ne.s32.totalorder %s204, %s220
      %p222 = scmp.eq.s32.totalorder %s32, 0
      %p223 = por %p221, %p222
      %s224 = ssub.s32 %s33, %s45
      %s225 = ssub.s32 %s34, %s41
      %s226 = sor.u32 %s224, %s225
      %p227 = scmp.eq.s32.totalorder %s226, 0
      %s229 = sadd.s32 %s228, 1
      %s230 = scalar_select %p227, %s228, %s229
      %p233 = pneg %p227
      %p234 = scmp.eq.s32.totalorder %s26, 3
      %p235 = por %p233, %p234
      %p236 = scmp.ne.s32.totalorder %s228, %s231
      %p237 = scmp.eq.s32.totalorder %s26, 0
      %p238 = por %p236, %p237
      %p239 = scmp.ne.s32.totalorder %s228, %s231
      %p240 = scmp.eq.s32.totalorder %s31, 3
      %p241 = por %p239, %p240
      %p242 = scmp.ne.s32.totalorder %s231, %s232
      %p243 = scmp.eq.s32.totalorder %s31, 0
      %p244 = por %p242, %p243
      %p245 = scmp.ne.s32.totalorder %s231, %s232
      %p246 = scmp.eq.s32.totalorder %s32, 3
      %p247 = por %p245, %p246
      %p249 = scmp.ne.s32.totalorder %s232, %s248
      %p250 = scmp.eq.s32.totalorder %s32, 0
      %p251 = por %p249, %p250
      %p252 = scmp.le.s32.totalorder 1, %s26
      %p253 = scmp.lt.s32.totalorder %s26, 5
      %p254 = pnand %p252, %p253
      %p255 = pneg %p254
      // Predicated region
      $region9: #{tpu_custom_call.1} parent=5 // pred_check
        _
      $region10: #{tpu_custom_call.1} parent=5 // pred_check_branch
        %257 = sbr.rel (%p254) target = $region12
      $region11: #{tpu_custom_call.1} parent=5 // pred_region
        %s258 = ssub.s32 %s26, 1
        // Predicated region
        $region13: #{tpu_custom_call.1} parent=11 // pred_check
          %p259 = pneg %p139
        $region14: #{tpu_custom_call.1} parent=11 // pred_check_branch
          %261 = sbr.rel (%p259) target = $region16
        $region15: #{tpu_custom_call.1} parent=11 // pred_region
          %s263 = ssub.s32 3072, 3072
          %264 = vsyncadd [#allocation6], %s263
          %s265 = sshll.u32 [#allocation7], 4
          %s266 = int_to_ptr.vmem [resolvable:$true] %s265
          %271 = dma.hbm_to_vmem [thread:$0]  %s3, 3072, %s266, [#allocation6], 192, 192, 12
        $region16: #{tpu_custom_call.1} parent=11 // pred_fallthru
          _
        // Predicated region
        $region17: #{tpu_custom_call.1} parent=11 // pred_check
          %p272 = pneg %p160
        $region18: #{tpu_custom_call.1} parent=11 // pred_check_branch
          %274 = sbr.rel (%p272) target = $region20
        $region19: #{tpu_custom_call.1} parent=11 // pred_region
          _
        $region20: #{tpu_custom_call.1} parent=11 // pred_fallthru
          _
      $region12: #{tpu_custom_call.1} parent=5 // pred_fallthru
        _
      %p275 = scmp.lt.s32.totalorder %s26, 4
      // Predicated region
      $region21: #{tpu_custom_call.1} parent=5 // pred_check
        %p276 = pneg %p275
      $region22: #{tpu_custom_call.1} parent=5 // pred_check_branch
        %278 = sbr.rel (%p276) target = $region24
      $region23: #{tpu_custom_call.1} parent=5 // pred_region
        // Predicated region
        $region25: #{tpu_custom_call.1} parent=23 // pred_check
          %p279 = pneg %p60
        $region26: #{tpu_custom_call.1} parent=23 // pred_check_branch
          %281 = sbr.rel (%p279) target = $region28
        $region27: #{tpu_custom_call.1} parent=23 // pred_region
          %s282 = sand.u32 %s50, 1
          %s283 = scalar_lea.sflag [#allocation3], %s282
          %s284 = sand.u32 %s50, 1
          %s285 = smul.addr %s284, 512
          %s286 = scalar_lea.vmem [#allocation2], %s285
          %s287 = smul.u32 64, %s34
          %s289 = ssub.s32 8192, 8192
          %290 = vsyncadd %s283, %s289
          %s291 = smul.addr %s33, 128
          %s292 = sadd.s32 %s287, %s291
          %s293 = smul.addr %s292, 128
          %s294 = scalar_lea.hbm %s0, %s293
          %s295 = sshll.u32 %s286, 4
          %s296 = int_to_ptr.vmem [resolvable:$true] %s295
          %301 = dma.hbm_to_vmem [thread:$0]  %s294, 8192, %s296, %s283, 128, 128, 8
        $region28: #{tpu_custom_call.1} parent=23 // pred_fallthru
          _
        // Predicated region
        $region29: #{tpu_custom_call.1} parent=23 // pred_check
          %p302 = pneg %p86
        $region30: #{tpu_custom_call.1} parent=23 // pred_check_branch
          %304 = sbr.rel (%p302) target = $region32
        $region31: #{tpu_custom_call.1} parent=23 // pred_region
          %s305 = sand.u32 %s26, 1
          %s306 = scalar_lea.sflag [#allocation6], %s305
          %s307 = sand.u32 %s76, 1
          %s308 = scalar_lea.vmem [#allocation5], %s307
          %s310 = ssub.s32 16, 16
          %311 = vsyncadd %s306, %s310
          %s312 = smul.addr %s33, 16
          %s313 = scalar_lea.hbm %s1, %s312
          %s315 = sshll.u32 %s308, 4
          %s316 = int_to_ptr.vmem [resolvable:$true] %s315
          %318 = dma.hbm_to_vmem [thread:$0]  %s313, 16, %s316, %s306
        $region32: #{tpu_custom_call.1} parent=23 // pred_fallthru
          _
        // Predicated region
        $region33: #{tpu_custom_call.1} parent=23 // pred_check
          %p319 = pneg %p112
        $region34: #{tpu_custom_call.1} parent=23 // pred_check_branch
          %321 = sbr.rel (%p319) target = $region36
        $region35: #{tpu_custom_call.1} parent=23 // pred_region
          %p322 = scmp.lt.s32.totalorder %s33, 1
          %s323 = scalar_select %p322, %s33, 1
          %s324 = scalar_lea.vmem %s2, %s323
        $region36: #{tpu_custom_call.1} parent=23 // pred_fallthru
          _
      $region24: #{tpu_custom_call.1} parent=5 // pred_fallthru
        _
      %p325 = scmp.le.s32.totalorder 1, %s26
      %p326 = scmp.lt.s32.totalorder %s26, 5
      %p327 = pnand %p325, %p326
      %p328 = pneg %p327
      // Predicated region
      $region37: #{tpu_custom_call.1} parent=5 // pred_check
        _
      $region38: #{tpu_custom_call.1} parent=5 // pred_check_branch
        %330 = sbr.rel (%p327) target = $region40
      $region39: #{tpu_custom_call.1} parent=5 // pred_region
        %s331 = ssub.s32 %s26, 1
        %s332 = sand.u32 %s53, 1
        %s333 = scalar_lea.sflag [#allocation3], %s332
        %s334 = sand.u32 %s53, 1
        %s335 = smul.addr %s334, 512
        %s336 = scalar_lea.vmem [#allocation2], %s335
        // Predicated region
        $region41: #{tpu_custom_call.1} parent=39 // pred_check
          %p337 = pneg %p66
        $region42: #{tpu_custom_call.1} parent=39 // pred_check_branch
          %339 = sbr.rel (%p337) target = $region44
        $region43: #{tpu_custom_call.1} parent=39 // pred_region
          %340 = dma.done %s333, 8192
        $region44: #{tpu_custom_call.1} parent=39 // pred_fallthru
          _
        %s341 = sand.u32 %s31, 1
        %s342 = scalar_lea.sflag [#allocation6], %s341
        %s343 = sand.u32 %s79, 1
        %s344 = scalar_lea.vmem [#allocation5], %s343
        // Predicated region
        $region45: #{tpu_custom_call.1} parent=39 // pred_check
          %p345 = pneg %p92
        $region46: #{tpu_custom_call.1} parent=39 // pred_check_branch
          %347 = sbr.rel (%p345) target = $region48
        $region47: #{tpu_custom_call.1} parent=39 // pred_region
          %348 = dma.done %s342, 16
        $region48: #{tpu_custom_call.1} parent=39 // pred_fallthru
          _
        // Predicated region
        $region49: #{tpu_custom_call.1} parent=39 // pred_check
          %p349 = pneg %p139
        $region50: #{tpu_custom_call.1} parent=39 // pred_check_branch
          %351 = sbr.rel (%p349) target = $region52
        $region51: #{tpu_custom_call.1} parent=39 // pred_region
          %352 = dma.done [#allocation6], 3072
        $region52: #{tpu_custom_call.1} parent=39 // pred_fallthru
          _
        %s353 = sand.u32 %s53, 1
        %s354 = scalar_lea.sflag [#allocation3], %s353
        %s355 = sand.u32 %s53, 1
        %s356 = smul.addr %s355, 512
        %s357 = scalar_lea.vmem [#allocation2], %s356
        %p358 = pneg %p66
        %p359 = pneg %p63
        %s360 = sand.u32 %s31, 1
        %s361 = scalar_lea.sflag [#allocation6], %s360
        %s362 = sand.u32 %s79, 1
        %s363 = scalar_lea.vmem [#allocation5], %s362
        %p364 = pneg %p92
        %p365 = pneg %p89
        %p366 = scmp.lt.s32.totalorder %s35, 1
        %s367 = scalar_select %p366, %s35, 1
        %s368 = scalar_lea.vmem %s2, %s367
        %p369 = pneg %p118
        %p370 = pneg %p115
        %p371 = pneg %p139
        %p372 = pneg %p136
        %p373 = pneg %p160
        %p374 = pneg %p157
        %p375 = pneg %p188
        %p376 = pneg %p185
        %s377 = sand.u32 %s175, 1
        %s378 = scalar_lea.sflag [#allocation4], %s377
        %s379 = sand.u32 %s175, 1
        %s380 = smul.addr %s379, 256
        %s381 = scalar_lea.vmem [#allocation8], %s380
        %p382 = pneg %p216
        %p383 = pneg %p213
        %s384 = sand.u32 %s31, 1
        %s385 = scalar_lea.sflag [#allocation10], %s384
        %s386 = sand.u32 %s203, 1
        %s387 = smul.addr %s386, 256
        %s388 = scalar_lea.vmem [#allocation9], %s387
        %p389 = pneg %p244
        %p390 = pneg %p241
        %s391 = sand.u32 %s31, 1
        %s392 = scalar_lea.sflag [#allocation10], %s391
        %s393 = sand.u32 %s231, 1
        %s394 = smul.addr %s393, 256
        %s395 = scalar_lea.vmem [#allocation11], %s394
        %s396 = smul.u32 64, %s36
        %p397 = scmp.lt.s32.totalorder %s35, 1
        %s398 = scalar_select %p397, %s35, 1
        %s399 = scalar_lea.vmem %s2, %s398
        %s400 = smul.u32 64, %s36
        %s401 = smul.u32 64, %s36
        %s402 = smul.u32 64, %s36
        %v404 = vld [vmem:[%s336] sm:$0xff]
        %v405 = vld [vmem:[%s336 + $0x8] sm:$0xff]
        %v406 = vld [vmem:[%s336 + $0x10] sm:$0xff]
        %v407 = vld [vmem:[%s336 + $0x18] sm:$0xff]
        %v408 = vld [vmem:[%s336 + $0x20] sm:$0xff]
        %v409 = vld [vmem:[%s336 + $0x28] sm:$0xff]
        %v410 = vld [vmem:[%s336 + $0x30] sm:$0xff]
        %v411 = vld [vmem:[%s336 + $0x38] sm:$0xff]
        %v412 = vld [vmem:[%s336 + $0x40] sm:$0xff]
        %v413 = vld [vmem:[%s336 + $0x48] sm:$0xff]
        %v414 = vld [vmem:[%s336 + $0x50] sm:$0xff]
        %v415 = vld [vmem:[%s336 + $0x58] sm:$0xff]
        %v416 = vld [vmem:[%s336 + $0x60] sm:$0xff]
        %v417 = vld [vmem:[%s336 + $0x68] sm:$0xff]
        %v418 = vld [vmem:[%s336 + $0x70] sm:$0xff]
        %v419 = vld [vmem:[%s336 + $0x78] sm:$0xff]
        %v420 = vld [vmem:[%s336 + $0x80] sm:$0xff]
        %v421 = vld [vmem:[%s336 + $0x88] sm:$0xff]
        %v422 = vld [vmem:[%s336 + $0x90] sm:$0xff]
        %v423 = vld [vmem:[%s336 + $0x98] sm:$0xff]
        %v424 = vld [vmem:[%s336 + $0xa0] sm:$0xff]
        %v425 = vld [vmem:[%s336 + $0xa8] sm:$0xff]
        %v426 = vld [vmem:[%s336 + $0xb0] sm:$0xff]
        %v427 = vld [vmem:[%s336 + $0xb8] sm:$0xff]
        %v428 = vld [vmem:[%s336 + $0xc0] sm:$0xff]
        %v429 = vld [vmem:[%s336 + $0xc8] sm:$0xff]
        %v430 = vld [vmem:[%s336 + $0xd0] sm:$0xff]
        %v431 = vld [vmem:[%s336 + $0xd8] sm:$0xff]
        %v432 = vld [vmem:[%s336 + $0xe0] sm:$0xff]
        %v433 = vld [vmem:[%s336 + $0xe8] sm:$0xff]
        %v434 = vld [vmem:[%s336 + $0xf0] sm:$0xff]
        %v435 = vld [vmem:[%s336 + $0xf8] sm:$0xff]
        %v436 = vld [vmem:[%s336 + $0x100] sm:$0xff]
        %v437 = vld [vmem:[%s336 + $0x108] sm:$0xff]
        %v438 = vld [vmem:[%s336 + $0x110] sm:$0xff]
        %v439 = vld [vmem:[%s336 + $0x118] sm:$0xff]
        %v440 = vld [vmem:[%s336 + $0x120] sm:$0xff]
        %v441 = vld [vmem:[%s336 + $0x128] sm:$0xff]
        %v442 = vld [vmem:[%s336 + $0x130] sm:$0xff]
        %v443 = vld [vmem:[%s336 + $0x138] sm:$0xff]
        %v444 = vld [vmem:[%s336 + $0x140] sm:$0xff]
        %v445 = vld [vmem:[%s336 + $0x148] sm:$0xff]
        %v446 = vld [vmem:[%s336 + $0x150] sm:$0xff]
        %v447 = vld [vmem:[%s336 + $0x158] sm:$0xff]
        %v448 = vld [vmem:[%s336 + $0x160] sm:$0xff]
        %v449 = vld [vmem:[%s336 + $0x168] sm:$0xff]
        %v450 = vld [vmem:[%s336 + $0x170] sm:$0xff]
        %v451 = vld [vmem:[%s336 + $0x178] sm:$0xff]
        %v452 = vld [vmem:[%s336 + $0x180] sm:$0xff]
        %v453 = vld [vmem:[%s336 + $0x188] sm:$0xff]
        %v454 = vld [vmem:[%s336 + $0x190] sm:$0xff]
        %v455 = vld [vmem:[%s336 + $0x198] sm:$0xff]
        %v456 = vld [vmem:[%s336 + $0x1a0] sm:$0xff]
        %v457 = vld [vmem:[%s336 + $0x1a8] sm:$0xff]
        %v458 = vld [vmem:[%s336 + $0x1b0] sm:$0xff]
        %v459 = vld [vmem:[%s336 + $0x1b8] sm:$0xff]
        %v460 = vld [vmem:[%s336 + $0x1c0] sm:$0xff]
        %v461 = vld [vmem:[%s336 + $0x1c8] sm:$0xff]
        %v462 = vld [vmem:[%s336 + $0x1d0] sm:$0xff]
        %v463 = vld [vmem:[%s336 + $0x1d8] sm:$0xff]
        %v464 = vld [vmem:[%s336 + $0x1e0] sm:$0xff]
        %v465 = vld [vmem:[%s336 + $0x1e8] sm:$0xff]
        %v466 = vld [vmem:[%s336 + $0x1f0] sm:$0xff]
        %v467 = vld [vmem:[%s336 + $0x1f8] sm:$0xff]
        %v468 = vld [vmem:[%s344] sm:$0x1]
        %v470 = vlaneseq
        %v471 = vshrl.u32 %v470, 7
        %v472 = vsub.s32 0, %v471
        %v473 = vrot.slane %v468, %v472
        %v475 = vmul.f32 %v404, %v473
        %v476 = vmul.f32 %v405, %v473
        %v477 = vmul.f32 %v406, %v473
        %v478 = vmul.f32 %v407, %v473
        %v479 = vmul.f32 %v408, %v473
        %v480 = vmul.f32 %v409, %v473
        %v481 = vmul.f32 %v410, %v473
        %v482 = vmul.f32 %v411, %v473
        %v483 = vmul.f32 %v412, %v473
        %v484 = vmul.f32 %v413, %v473
        %v485 = vmul.f32 %v414, %v473
        %v486 = vmul.f32 %v415, %v473
        %v487 = vmul.f32 %v416, %v473
        %v488 = vmul.f32 %v417, %v473
        %v489 = vmul.f32 %v418, %v473
        %v490 = vmul.f32 %v419, %v473
        %v491 = vmul.f32 %v420, %v473
        %v492 = vmul.f32 %v421, %v473
        %v493 = vmul.f32 %v422, %v473
        %v494 = vmul.f32 %v423, %v473
        %v495 = vmul.f32 %v424, %v473
        %v496 = vmul.f32 %v425, %v473
        %v497 = vmul.f32 %v426, %v473
        %v498 = vmul.f32 %v427, %v473
        %v499 = vmul.f32 %v428, %v473
        %v500 = vmul.f32 %v429, %v473
        %v501 = vmul.f32 %v430, %v473
        %v502 = vmul.f32 %v431, %v473
        %v503 = vmul.f32 %v432, %v473
        %v504 = vmul.f32 %v433, %v473
        %v505 = vmul.f32 %v434, %v473
        %v506 = vmul.f32 %v435, %v473
        %v507 = vmul.f32 %v436, %v473
        %v508 = vmul.f32 %v437, %v473
        %v509 = vmul.f32 %v438, %v473
        %v510 = vmul.f32 %v439, %v473
        %v511 = vmul.f32 %v440, %v473
        %v512 = vmul.f32 %v441, %v473
        %v513 = vmul.f32 %v442, %v473
        %v514 = vmul.f32 %v443, %v473
        %v515 = vmul.f32 %v444, %v473
        %v516 = vmul.f32 %v445, %v473
        %v517 = vmul.f32 %v446, %v473
        %v518 = vmul.f32 %v447, %v473
        %v519 = vmul.f32 %v448, %v473
        %v520 = vmul.f32 %v449, %v473
        %v521 = vmul.f32 %v450, %v473
        %v522 = vmul.f32 %v451, %v473
        %v523 = vmul.f32 %v452, %v473
        %v524 = vmul.f32 %v453, %v473
        %v525 = vmul.f32 %v454, %v473
        %v526 = vmul.f32 %v455, %v473
        %v527 = vmul.f32 %v456, %v473
        %v528 = vmul.f32 %v457, %v473
        %v529 = vmul.f32 %v458, %v473
        %v530 = vmul.f32 %v459, %v473
        %v531 = vmul.f32 %v460, %v473
        %v532 = vmul.f32 %v461, %v473
        %v533 = vmul.f32 %v462, %v473
        %v534 = vmul.f32 %v463, %v473
        %v535 = vmul.f32 %v464, %v473
        %v536 = vmul.f32 %v465, %v473
        %v537 = vmul.f32 %v466, %v473
        %v538 = vmul.f32 %v467, %v473
        %v539 = vld [vmem:[%s399] sm:$0x1]
        %v541 = vlaneseq
        %v542 = vshrl.u32 %v541, 7
        %v543 = vsub.s32 0, %v542
        %v544 = vrot.slane %v539, %v543
        %v546 = vadd.f32 %v475, %v544
        %v547 = vadd.f32 %v476, %v544
        %v548 = vadd.f32 %v477, %v544
        %v549 = vadd.f32 %v478, %v544
        %v550 = vadd.f32 %v479, %v544
        %v551 = vadd.f32 %v480, %v544
        %v552 = vadd.f32 %v481, %v544
        %v553 = vadd.f32 %v482, %v544
        %v554 = vadd.f32 %v483, %v544
        %v555 = vadd.f32 %v484, %v544
        %v556 = vadd.f32 %v485, %v544
        %v557 = vadd.f32 %v486, %v544
        %v558 = vadd.f32 %v487, %v544
        %v559 = vadd.f32 %v488, %v544
        %v560 = vadd.f32 %v489, %v544
        %v561 = vadd.f32 %v490, %v544
        %v562 = vadd.f32 %v491, %v544
        %v563 = vadd.f32 %v492, %v544
        %v564 = vadd.f32 %v493, %v544
        %v565 = vadd.f32 %v494, %v544
        %v566 = vadd.f32 %v495, %v544
        %v567 = vadd.f32 %v496, %v544
        %v568 = vadd.f32 %v497, %v544
        %v569 = vadd.f32 %v498, %v544
        %v570 = vadd.f32 %v499, %v544
        %v571 = vadd.f32 %v500, %v544
        %v572 = vadd.f32 %v501, %v544
        %v573 = vadd.f32 %v502, %v544
        %v574 = vadd.f32 %v503, %v544
        %v575 = vadd.f32 %v504, %v544
        %v576 = vadd.f32 %v505, %v544
        %v577 = vadd.f32 %v506, %v544
        %v578 = vadd.f32 %v507, %v544
        %v579 = vadd.f32 %v508, %v544
        %v580 = vadd.f32 %v509, %v544
        %v581 = vadd.f32 %v510, %v544
        %v582 = vadd.f32 %v511, %v544
        %v583 = vadd.f32 %v512, %v544
        %v584 = vadd.f32 %v513, %v544
        %v585 = vadd.f32 %v514, %v544
        %v586 = vadd.f32 %v515, %v544
        %v587 = vadd.f32 %v516, %v544
        %v588 = vadd.f32 %v517, %v544
        %v589 = vadd.f32 %v518, %v544
        %v590 = vadd.f32 %v519, %v544
        %v591 = vadd.f32 %v520, %v544
        %v592 = vadd.f32 %v521, %v544
        %v593 = vadd.f32 %v522, %v544
        %v594 = vadd.f32 %v523, %v544
        %v595 = vadd.f32 %v524, %v544
        %v596 = vadd.f32 %v525, %v544
        %v597 = vadd.f32 %v526, %v544
        %v598 = vadd.f32 %v527, %v544
        %v599 = vadd.f32 %v528, %v544
        %v600 = vadd.f32 %v529, %v544
        %v601 = vadd.f32 %v530, %v544
        %v602 = vadd.f32 %v531, %v544
        %v603 = vadd.f32 %v532, %v544
        %v604 = vadd.f32 %v533, %v544
        %v605 = vadd.f32 %v534, %v544
        %v606 = vadd.f32 %v535, %v544
        %v607 = vadd.f32 %v536, %v544
        %v608 = vadd.f32 %v537, %v544
        %v609 = vadd.f32 %v538, %v544
        %v610 = vpack.c.bf16 %v547, %v546
        %v611 = vpack.c.bf16 %v549, %v548
        %v612 = vpack.c.bf16 %v551, %v550
        %v613 = vpack.c.bf16 %v553, %v552
        %v614 = vpack.c.bf16 %v555, %v554
        %v615 = vpack.c.bf16 %v557, %v556
        %v616 = vpack.c.bf16 %v559, %v558
        %v617 = vpack.c.bf16 %v561, %v560
        %v618 = vpack.c.bf16 %v563, %v562
        %v619 = vpack.c.bf16 %v565, %v564
        %v620 = vpack.c.bf16 %v567, %v566
        %v621 = vpack.c.bf16 %v569, %v568
        %v622 = vpack.c.bf16 %v571, %v570
        %v623 = vpack.c.bf16 %v573, %v572
        %v624 = vpack.c.bf16 %v575, %v574
        %v625 = vpack.c.bf16 %v577, %v576
        %v626 = vpack.c.bf16 %v579, %v578
        %v627 = vpack.c.bf16 %v581, %v580
        %v628 = vpack.c.bf16 %v583, %v582
        %v629 = vpack.c.bf16 %v585, %v584
        %v630 = vpack.c.bf16 %v587, %v586
        %v631 = vpack.c.bf16 %v589, %v588
        %v632 = vpack.c.bf16 %v591, %v590
        %v633 = vpack.c.bf16 %v593, %v592
        %v634 = vpack.c.bf16 %v595, %v594
        %v635 = vpack.c.bf16 %v597, %v596
        %v636 = vpack.c.bf16 %v599, %v598
        %v637 = vpack.c.bf16 %v601, %v600
        %v638 = vpack.c.bf16 %v603, %v602
        %v639 = vpack.c.bf16 %v605, %v604
        %v640 = vpack.c.bf16 %v607, %v606
        %v641 = vpack.c.bf16 %v609, %v608
        %v642 = vld [vmem:[#allocation7] sm:$0xff]
        %v643 = vld [vmem:[#allocation7 + $0x8] sm:$0xf]
        %v644 = vld [vmem:[#allocation7 + $0xc] sm:$0xff]
        %v645 = vld [vmem:[#allocation7 + $0x14] sm:$0xf]
        %v646 = vld [vmem:[#allocation7 + $0x18] sm:$0xff]
        %v647 = vld [vmem:[#allocation7 + $0x20] sm:$0xf]
        %v648 = vld [vmem:[#allocation7 + $0x24] sm:$0xff]
        %v649 = vld [vmem:[#allocation7 + $0x2c] sm:$0xf]
        %v650 = vld [vmem:[#allocation7 + $0x30] sm:$0xff]
        %v651 = vld [vmem:[#allocation7 + $0x38] sm:$0xf]
        %v652 = vld [vmem:[#allocation7 + $0x3c] sm:$0xff]
        %v653 = vld [vmem:[#allocation7 + $0x44] sm:$0xf]
        %v654 = vld [vmem:[#allocation7 + $0x48] sm:$0xff]
        %v655 = vld [vmem:[#allocation7 + $0x50] sm:$0xf]
        %v656 = vld [vmem:[#allocation7 + $0x54] sm:$0xff]
        %v657 = vld [vmem:[#allocation7 + $0x5c] sm:$0xf]
        %v658 = vld [vmem:[#allocation7 + $0x60] sm:$0xff]
        %v659 = vld [vmem:[#allocation7 + $0x68] sm:$0xf]
        %v660 = vld [vmem:[#allocation7 + $0x6c] sm:$0xff]
        %v661 = vld [vmem:[#allocation7 + $0x74] sm:$0xf]
        %v662 = vld [vmem:[#allocation7 + $0x78] sm:$0xff]
        %v663 = vld [vmem:[#allocation7 + $0x80] sm:$0xf]
        %v664 = vld [vmem:[#allocation7 + $0x84] sm:$0xff]
        %v665 = vld [vmem:[#allocation7 + $0x8c] sm:$0xf]
        %v666 = vld [vmem:[#allocation7 + $0x90] sm:$0xff]
        %v667 = vld [vmem:[#allocation7 + $0x98] sm:$0xf]
        %v668 = vld [vmem:[#allocation7 + $0x9c] sm:$0xff]
        %v669 = vld [vmem:[#allocation7 + $0xa4] sm:$0xf]
        %v670 = vld [vmem:[#allocation7 + $0xa8] sm:$0xff]
        %v671 = vld [vmem:[#allocation7 + $0xb0] sm:$0xf]
        %v672 = vld [vmem:[#allocation7 + $0xb4] sm:$0xff]
        %v673 = vld [vmem:[#allocation7 + $0xbc] sm:$0xf]
        %v674 = vld [vmem:[%s4] sm:$0x7]
        %v676 = vlaneseq
        %v677 = vshrl.u32 %v676, 7
        %v678 = vsub.s32 0, %v677
        %v679 = vrot.slane %v674, %v678
        %v680 = vlaneseq
        %v681 = vshrl.u32 %v680, 7
        %v682 = vsub.s32 1, %v681
        %v683 = vrot.slane %v674, %v682
        %v684 = vlaneseq
        %v685 = vshrl.u32 %v684, 7
        %v686 = vsub.s32 2, %v685
        %v687 = vrot.slane %v674, %v686
        %v723 = vunpack.c.l.b16 %v642
        %v724 = vunpack.c.h.b16 %v642
        %v725 = vunpack.c.l.b16 %v643
        %v726 = vunpack.c.l.b16 %v644
        %v727 = vunpack.c.h.b16 %v644
        %v728 = vunpack.c.l.b16 %v645
        %v729 = vunpack.c.l.b16 %v646
        %v730 = vunpack.c.h.b16 %v646
        %v731 = vunpack.c.l.b16 %v647
        %v732 = vunpack.c.l.b16 %v648
        %v733 = vunpack.c.h.b16 %v648
        %v734 = vunpack.c.l.b16 %v649
        %v735 = vunpack.c.l.b16 %v650
        %v736 = vunpack.c.h.b16 %v650
        %v737 = vunpack.c.l.b16 %v651
        %v738 = vunpack.c.l.b16 %v652
        %v739 = vunpack.c.h.b16 %v652
        %v740 = vunpack.c.l.b16 %v653
        %v741 = vunpack.c.l.b16 %v654
        %v742 = vunpack.c.h.b16 %v654
        %v743 = vunpack.c.l.b16 %v655
        %v744 = vunpack.c.l.b16 %v656
        %v745 = vunpack.c.h.b16 %v656
        %v746 = vunpack.c.l.b16 %v657
        %v747 = vunpack.c.l.b16 %v658
        %v748 = vunpack.c.h.b16 %v658
        %v749 = vunpack.c.l.b16 %v659
        %v750 = vunpack.c.l.b16 %v660
        %v751 = vunpack.c.h.b16 %v660
        %v752 = vunpack.c.l.b16 %v661
        %v753 = vunpack.c.l.b16 %v662
        %v754 = vunpack.c.h.b16 %v662
        %v755 = vunpack.c.l.b16 %v663
        %v756 = vunpack.c.l.b16 %v664
        %v757 = vunpack.c.h.b16 %v664
        %v758 = vunpack.c.l.b16 %v665
        %v759 = vunpack.c.l.b16 %v666
        %v760 = vunpack.c.h.b16 %v666
        %v761 = vunpack.c.l.b16 %v667
        %v762 = vunpack.c.l.b16 %v668
        %v763 = vunpack.c.h.b16 %v668
        %v764 = vunpack.c.l.b16 %v669
        %v765 = vunpack.c.l.b16 %v670
        %v766 = vunpack.c.h.b16 %v670
        %v767 = vunpack.c.l.b16 %v671
        %v768 = vunpack.c.l.b16 %v672
        %v769 = vunpack.c.h.b16 %v672
        %v770 = vunpack.c.l.b16 %v673
        %v771 = vpack.c.b16 %v726, %v723
        %v772 = vpack.c.b16 %v727, %v724
        %v773 = vpack.c.b16 %v728, %v725
        %v774 = vpack.c.b16 %v732, %v729
        %v775 = vpack.c.b16 %v733, %v730
        %v776 = vpack.c.b16 %v734, %v731
        %v777 = vpack.c.b16 %v738, %v735
        %v778 = vpack.c.b16 %v739, %v736
        %v779 = vpack.c.b16 %v740, %v737
        %v780 = vpack.c.b16 %v744, %v741
        %v781 = vpack.c.b16 %v745, %v742
        %v782 = vpack.c.b16 %v746, %v743
        %v783 = vpack.c.b16 %v750, %v747
        %v784 = vpack.c.b16 %v751, %v748
        %v785 = vpack.c.b16 %v752, %v749
        %v786 = vpack.c.b16 %v756, %v753
        %v787 = vpack.c.b16 %v757, %v754
        %v788 = vpack.c.b16 %v758, %v755
        %v789 = vpack.c.b16 %v762, %v759
        %v790 = vpack.c.b16 %v763, %v760
        %v791 = vpack.c.b16 %v764, %v761
        %v792 = vpack.c.b16 %v768, %v765
        %v793 = vpack.c.b16 %v769, %v766
        %v794 = vpack.c.b16 %v770, %v767
        %819 = vmatprep.subr.bf16.mxu0 %v793
        %820 = vmatpush1.bf16.msra.mxu0 %v792
        %821 = vmatprep.subr.bf16.mxu0 %v790
        %822 = vmatpush1.bf16.msra.mxu0 %v789
        %823 = vmatprep.subr.bf16.mxu0 %v787
        %824 = vmatpush1.bf16.msra.mxu0 %v786
        %825 = vmatprep.subr.bf16.mxu0 %v784
        %826 = vmatpush1.bf16.msra.mxu0 %v783
        %827 = vmatprep.subr.bf16.mxu0 %v781
        %828 = vmatpush1.bf16.msra.mxu0 %v780
        %829 = vmatprep.subr.bf16.mxu0 %v778
        %830 = vmatpush1.bf16.msra.mxu0 %v777
        %831 = vmatprep.subr.bf16.mxu0 %v775
        %832 = vmatpush1.bf16.msra.mxu0 %v774
        %833 = vmatprep.subr.bf16.mxu0 %v772
        %834 = vmatpush1.bf16.msra.mxu0 %v771
        %835 = vmatprep.subr.bf16.mxu0 0
        %836 = vmatpush2.bf16.msra.mxu0 0
        %837 = vmatprep.subr.bf16.mxu0 0
        %838 = vmatpush2.bf16.msra.mxu0 0
        %839 = vmatprep.subr.bf16.mxu0 0
        %840 = vmatpush2.bf16.msra.mxu0 0
        %841 = vmatprep.subr.bf16.mxu0 0
        %842 = vmatpush2.bf16.msra.mxu0 0
        %843 = vmatprep.subr.bf16.mxu0 0
        %844 = vmatpush2.bf16.msra.mxu0 0
        %845 = vmatprep.subr.bf16.mxu0 0
        %846 = vmatpush2.bf16.msra.mxu0 0
        %847 = vmatprep.subr.bf16.mxu0 0
        %848 = vmatpush2.bf16.msra.mxu0 0
        %849 = vmatprep.subr.bf16.mxu0 0
        %850 = vmatpush2.bf16.msra.mxu0 0
        %851 = vmatprep.mubr.bf16.mxu0 0
        %852 = vmatmul.mubr.bf16.gmra.mxu0 %v610
        %v853 = vpop.f32.mrf.mxu0
        %v854 = vadd.f32 %v679, %v853
        %v855 = vpop.f32.mrf.mxu0
        %v856 = vadd.f32 %v683, %v855
        %v857 = vpop.f32.mrf.mxu0
        %v858 = vadd.f32 %v679, %v857
        %v859 = vpop.f32.mrf.mxu0
        %v860 = vadd.f32 %v683, %v859
        %861 = vmatprep.mubr.bf16.mxu0 0
        %862 = vmatmul.mubr.bf16.gmra.mxu0 %v611
        %v863 = vpop.f32.mrf.mxu0
        %v864 = vadd.f32 %v679, %v863
        %v865 = vpop.f32.mrf.mxu0
        %v866 = vadd.f32 %v683, %v865
        %v867 = vpop.f32.mrf.mxu0
        %v868 = vadd.f32 %v679, %v867
        %v869 = vpop.f32.mrf.mxu0
        %v870 = vadd.f32 %v683, %v869
        %871 = vmatprep.mubr.bf16.mxu0 0
        %872 = vmatmul.mubr.bf16.gmra.mxu0 %v612
        %v873 = vpop.f32.mrf.mxu0
        %v874 = vadd.f32 %v679, %v873
        %v875 = vpop.f32.mrf.mxu0
        %v876 = vadd.f32 %v683, %v875
        %v877 = vpop.f32.mrf.mxu0
        %v878 = vadd.f32 %v679, %v877
        %v879 = vpop.f32.mrf.mxu0
        %v880 = vadd.f32 %v683, %v879
        %881 = vmatprep.mubr.bf16.mxu0 0
        %882 = vmatmul.mubr.bf16.gmra.mxu0 %v613
        %v883 = vpop.f32.mrf.mxu0
        %v884 = vadd.f32 %v679, %v883
        %v885 = vpop.f32.mrf.mxu0
        %v886 = vadd.f32 %v683, %v885
        %v887 = vpop.f32.mrf.mxu0
        %v888 = vadd.f32 %v679, %v887
        %v889 = vpop.f32.mrf.mxu0
        %v890 = vadd.f32 %v683, %v889
        %891 = vmatprep.mubr.bf16.mxu0 0
        %892 = vmatmul.mubr.bf16.gmra.mxu0 %v614
        %v893 = vpop.f32.mrf.mxu0
        %v894 = vadd.f32 %v679, %v893
        %v895 = vpop.f32.mrf.mxu0
        %v896 = vadd.f32 %v683, %v895
        %v897 = vpop.f32.mrf.mxu0
        %v898 = vadd.f32 %v679, %v897
        %v899 = vpop.f32.mrf.mxu0
        %v900 = vadd.f32 %v683, %v899
        %901 = vmatprep.mubr.bf16.mxu0 0
        %902 = vmatmul.mubr.bf16.gmra.mxu0 %v615
        %v903 = vpop.f32.mrf.mxu0
        %v904 = vadd.f32 %v679, %v903
        %v905 = vpop.f32.mrf.mxu0
        %v906 = vadd.f32 %v683, %v905
        %v907 = vpop.f32.mrf.mxu0
        %v908 = vadd.f32 %v679, %v907
        %v909 = vpop.f32.mrf.mxu0
        %v910 = vadd.f32 %v683, %v909
        %911 = vmatprep.mubr.bf16.mxu0 0
        %912 = vmatmul.mubr.bf16.gmra.mxu0 %v616
        %v913 = vpop.f32.mrf.mxu0
        %v914 = vadd.f32 %v679, %v913
        %v915 = vpop.f32.mrf.mxu0
        %v916 = vadd.f32 %v683, %v915
        %v917 = vpop.f32.mrf.mxu0
        %v918 = vadd.f32 %v679, %v917
        %v919 = vpop.f32.mrf.mxu0
        %v920 = vadd.f32 %v683, %v919
        %921 = vmatprep.mubr.bf16.mxu0 0
        %922 = vmatmul.mubr.bf16.gmra.mxu0 %v617
        %v923 = vpop.f32.mrf.mxu0
        %v924 = vadd.f32 %v679, %v923
        %v925 = vpop.f32.mrf.mxu0
        %v926 = vadd.f32 %v683, %v925
        %v927 = vpop.f32.mrf.mxu0
        %v928 = vadd.f32 %v679, %v927
        %v929 = vpop.f32.mrf.mxu0
        %v930 = vadd.f32 %v683, %v929
        %931 = vmatprep.mubr.bf16.mxu0 0
        %932 = vmatmul.mubr.bf16.gmra.mxu0 %v618
        %v933 = vpop.f32.mrf.mxu0
        %v934 = vadd.f32 %v679, %v933
        %v935 = vpop.f32.mrf.mxu0
        %v936 = vadd.f32 %v683, %v935
        %v937 = vpop.f32.mrf.mxu0
        %v938 = vadd.f32 %v679, %v937
        %v939 = vpop.f32.mrf.mxu0
        %v940 = vadd.f32 %v683, %v939
        %941 = vmatprep.mubr.bf16.mxu0 0
        %942 = vmatmul.mubr.bf16.gmra.mxu0 %v619
        %v943 = vpop.f32.mrf.mxu0
        %v944 = vadd.f32 %v679, %v943
        %v945 = vpop.f32.mrf.mxu0
        %v946 = vadd.f32 %v683, %v945
        %v947 = vpop.f32.mrf.mxu0
        %v948 = vadd.f32 %v679, %v947
        %v949 = vpop.f32.mrf.mxu0
        %v950 = vadd.f32 %v683, %v949
        %951 = vmatprep.mubr.bf16.mxu0 0
        %952 = vmatmul.mubr.bf16.gmra.mxu0 %v620
        %v953 = vpop.f32.mrf.mxu0
        %v954 = vadd.f32 %v679, %v953
        %v955 = vpop.f32.mrf.mxu0
        %v956 = vadd.f32 %v683, %v955
        %v957 = vpop.f32.mrf.mxu0
        %v958 = vadd.f32 %v679, %v957
        %v959 = vpop.f32.mrf.mxu0
        %v960 = vadd.f32 %v683, %v959
        %961 = vmatprep.mubr.bf16.mxu0 0
        %962 = vmatmul.mubr.bf16.gmra.mxu0 %v621
        %v963 = vpop.f32.mrf.mxu0
        %v964 = vadd.f32 %v679, %v963
        %v965 = vpop.f32.mrf.mxu0
        %v966 = vadd.f32 %v683, %v965
        %v967 = vpop.f32.mrf.mxu0
        %v968 = vadd.f32 %v679, %v967
        %v969 = vpop.f32.mrf.mxu0
        %v970 = vadd.f32 %v683, %v969
        %971 = vmatprep.mubr.bf16.mxu0 0
        %972 = vmatmul.mubr.bf16.gmra.mxu0 %v622
        %v973 = vpop.f32.mrf.mxu0
        %v974 = vadd.f32 %v679, %v973
        %v975 = vpop.f32.mrf.mxu0
        %v976 = vadd.f32 %v683, %v975
        %v977 = vpop.f32.mrf.mxu0
        %v978 = vadd.f32 %v679, %v977
        %v979 = vpop.f32.mrf.mxu0
        %v980 = vadd.f32 %v683, %v979
        %981 = vmatprep.mubr.bf16.mxu0 0
        %982 = vmatmul.mubr.bf16.gmra.mxu0 %v623
        %v983 = vpop.f32.mrf.mxu0
        %v984 = vadd.f32 %v679, %v983
        %v985 = vpop.f32.mrf.mxu0
        %v986 = vadd.f32 %v683, %v985
        %v987 = vpop.f32.mrf.mxu0
        %v988 = vadd.f32 %v679, %v987
        %v989 = vpop.f32.mrf.mxu0
        %v990 = vadd.f32 %v683, %v989
        %991 = vmatprep.mubr.bf16.mxu0 0
        %992 = vmatmul.mubr.bf16.gmra.mxu0 %v624
        %v993 = vpop.f32.mrf.mxu0
        %v994 = vadd.f32 %v679, %v993
        %v995 = vpop.f32.mrf.mxu0
        %v996 = vadd.f32 %v683, %v995
        %v997 = vpop.f32.mrf.mxu0
        %v998 = vadd.f32 %v679, %v997
        %v999 = vpop.f32.mrf.mxu0
        %v1000 = vadd.f32 %v683, %v999
        %1001 = vmatprep.mubr.bf16.mxu0 0
        %1002 = vmatmul.mubr.bf16.gmra.mxu0 %v625
        %v1003 = vpop.f32.mrf.mxu0
        %v1004 = vadd.f32 %v679, %v1003
        %v1005 = vpop.f32.mrf.mxu0
        %v1006 = vadd.f32 %v683, %v1005
        %v1007 = vpop.f32.mrf.mxu0
        %v1008 = vadd.f32 %v679, %v1007
        %v1009 = vpop.f32.mrf.mxu0
        %v1010 = vadd.f32 %v683, %v1009
        %1011 = vmatprep.mubr.bf16.mxu0 0
        %1012 = vmatmul.mubr.bf16.gmra.mxu0 %v626
        %v1013 = vpop.f32.mrf.mxu0
        %v1014 = vadd.f32 %v679, %v1013
        %v1015 = vpop.f32.mrf.mxu0
        %v1016 = vadd.f32 %v683, %v1015
        %v1017 = vpop.f32.mrf.mxu0
        %v1018 = vadd.f32 %v679, %v1017
        %v1019 = vpop.f32.mrf.mxu0
        %v1020 = vadd.f32 %v683, %v1019
        %1021 = vmatprep.mubr.bf16.mxu0 0
        %1022 = vmatmul.mubr.bf16.gmra.mxu0 %v627
        %v1023 = vpop.f32.mrf.mxu0
        %v1024 = vadd.f32 %v679, %v1023
        %v1025 = vpop.f32.mrf.mxu0
        %v1026 = vadd.f32 %v683, %v1025
        %v1027 = vpop.f32.mrf.mxu0
        %v1028 = vadd.f32 %v679, %v1027
        %v1029 = vpop.f32.mrf.mxu0
        %v1030 = vadd.f32 %v683, %v1029
        %1031 = vmatprep.mubr.bf16.mxu0 0
        %1032 = vmatmul.mubr.bf16.gmra.mxu0 %v628
        %v1033 = vpop.f32.mrf.mxu0
        %v1034 = vadd.f32 %v679, %v1033
        %v1035 = vpop.f32.mrf.mxu0
        %v1036 = vadd.f32 %v683, %v1035
        %v1037 = vpop.f32.mrf.mxu0
        %v1038 = vadd.f32 %v679, %v1037
        %v1039 = vpop.f32.mrf.mxu0
        %v1040 = vadd.f32 %v683, %v1039
        %1041 = vmatprep.mubr.bf16.mxu0 0
        %1042 = vmatmul.mubr.bf16.gmra.mxu0 %v629
        %v1043 = vpop.f32.mrf.mxu0
        %v1044 = vadd.f32 %v679, %v1043
        %v1045 = vpop.f32.mrf.mxu0
        %v1046 = vadd.f32 %v683, %v1045
        %v1047 = vpop.f32.mrf.mxu0
        %v1048 = vadd.f32 %v679, %v1047
        %v1049 = vpop.f32.mrf.mxu0
        %v1050 = vadd.f32 %v683, %v1049
        %1051 = vmatprep.mubr.bf16.mxu0 0
        %1052 = vmatmul.mubr.bf16.gmra.mxu0 %v630
        %v1053 = vpop.f32.mrf.mxu0
        %v1054 = vadd.f32 %v679, %v1053
        %v1055 = vpop.f32.mrf.mxu0
        %v1056 = vadd.f32 %v683, %v1055
        %v1057 = vpop.f32.mrf.mxu0
        %v1058 = vadd.f32 %v679, %v1057
        %v1059 = vpop.f32.mrf.mxu0
        %v1060 = vadd.f32 %v683, %v1059
        %1061 = vmatprep.mubr.bf16.mxu0 0
        %1062 = vmatmul.mubr.bf16.gmra.mxu0 %v631
        %v1063 = vpop.f32.mrf.mxu0
        %v1064 = vadd.f32 %v679, %v1063
        %v1065 = vpop.f32.mrf.mxu0
        %v1066 = vadd.f32 %v683, %v1065
        %v1067 = vpop.f32.mrf.mxu0
        %v1068 = vadd.f32 %v679, %v1067
        %v1069 = vpop.f32.mrf.mxu0
        %v1070 = vadd.f32 %v683, %v1069
        %1071 = vmatprep.mubr.bf16.mxu0 0
        %1072 = vmatmul.mubr.bf16.gmra.mxu0 %v632
        %v1073 = vpop.f32.mrf.mxu0
        %v1074 = vadd.f32 %v679, %v1073
        %v1075 = vpop.f32.mrf.mxu0
        %v1076 = vadd.f32 %v683, %v1075
        %v1077 = vpop.f32.mrf.mxu0
        %v1078 = vadd.f32 %v679, %v1077
        %v1079 = vpop.f32.mrf.mxu0
        %v1080 = vadd.f32 %v683, %v1079
        %1081 = vmatprep.mubr.bf16.mxu0 0
        %1082 = vmatmul.mubr.bf16.gmra.mxu0 %v633
        %v1083 = vpop.f32.mrf.mxu0
        %v1084 = vadd.f32 %v679, %v1083
        %v1085 = vpop.f32.mrf.mxu0
        %v1086 = vadd.f32 %v683, %v1085
        %v1087 = vpop.f32.mrf.mxu0
        %v1088 = vadd.f32 %v679, %v1087
        %v1089 = vpop.f32.mrf.mxu0
        %v1090 = vadd.f32 %v683, %v1089
        %1091 = vmatprep.mubr.bf16.mxu0 0
        %1092 = vmatmul.mubr.bf16.gmra.mxu0 %v634
        %v1093 = vpop.f32.mrf.mxu0
        %v1094 = vadd.f32 %v679, %v1093
        %v1095 = vpop.f32.mrf.mxu0
        %v1096 = vadd.f32 %v683, %v1095
        %v1097 = vpop.f32.mrf.mxu0
        %v1098 = vadd.f32 %v679, %v1097
        %v1099 = vpop.f32.mrf.mxu0
        %v1100 = vadd.f32 %v683, %v1099
        %1101 = vmatprep.mubr.bf16.mxu0 0
        %1102 = vmatmul.mubr.bf16.gmra.mxu0 %v635
        %v1103 = vpop.f32.mrf.mxu0
        %v1104 = vadd.f32 %v679, %v1103
        %v1105 = vpop.f32.mrf.mxu0
        %v1106 = vadd.f32 %v683, %v1105
        %v1107 = vpop.f32.mrf.mxu0
        %v1108 = vadd.f32 %v679, %v1107
        %v1109 = vpop.f32.mrf.mxu0
        %v1110 = vadd.f32 %v683, %v1109
        %1111 = vmatprep.mubr.bf16.mxu0 0
        %1112 = vmatmul.mubr.bf16.gmra.mxu0 %v636
        %v1113 = vpop.f32.mrf.mxu0
        %v1114 = vadd.f32 %v679, %v1113
        %v1115 = vpop.f32.mrf.mxu0
        %v1116 = vadd.f32 %v683, %v1115
        %v1117 = vpop.f32.mrf.mxu0
        %v1118 = vadd.f32 %v679, %v1117
        %v1119 = vpop.f32.mrf.mxu0
        %v1120 = vadd.f32 %v683, %v1119
        %1121 = vmatprep.mubr.bf16.mxu0 0
        %1122 = vmatmul.mubr.bf16.gmra.mxu0 %v637
        %v1123 = vpop.f32.mrf.mxu0
        %v1124 = vadd.f32 %v679, %v1123
        %v1125 = vpop.f32.mrf.mxu0
        %v1126 = vadd.f32 %v683, %v1125
        %v1127 = vpop.f32.mrf.mxu0
        %v1128 = vadd.f32 %v679, %v1127
        %v1129 = vpop.f32.mrf.mxu0
        %v1130 = vadd.f32 %v683, %v1129
        %1131 = vmatprep.mubr.bf16.mxu0 0
        %1132 = vmatmul.mubr.bf16.gmra.mxu0 %v638
        %v1133 = vpop.f32.mrf.mxu0
        %v1134 = vadd.f32 %v679, %v1133
        %v1135 = vpop.f32.mrf.mxu0
        %v1136 = vadd.f32 %v683, %v1135
        %v1137 = vpop.f32.mrf.mxu0
        %v1138 = vadd.f32 %v679, %v1137
        %v1139 = vpop.f32.mrf.mxu0
        %v1140 = vadd.f32 %v683, %v1139
        %1141 = vmatprep.mubr.bf16.mxu0 0
        %1142 = vmatmul.mubr.bf16.gmra.mxu0 %v639
        %v1143 = vpop.f32.mrf.mxu0
        %v1144 = vadd.f32 %v679, %v1143
        %v1145 = vpop.f32.mrf.mxu0
        %v1146 = vadd.f32 %v683, %v1145
        %v1147 = vpop.f32.mrf.mxu0
        %v1148 = vadd.f32 %v679, %v1147
        %v1149 = vpop.f32.mrf.mxu0
        %v1150 = vadd.f32 %v683, %v1149
        %1151 = vmatprep.mubr.bf16.mxu0 0
        %1152 = vmatmul.mubr.bf16.gmra.mxu0 %v640
        %v1153 = vpop.f32.mrf.mxu0
        %v1154 = vadd.f32 %v679, %v1153
        %v1155 = vpop.f32.mrf.mxu0
        %v1156 = vadd.f32 %v683, %v1155
        %v1157 = vpop.f32.mrf.mxu0
        %v1158 = vadd.f32 %v679, %v1157
        %v1159 = vpop.f32.mrf.mxu0
        %v1160 = vadd.f32 %v683, %v1159
        %1161 = vmatprep.mubr.bf16.mxu0 0
        %1162 = vmatmul.mubr.bf16.gmra.mxu0 %v641
        %v1163 = vpop.f32.mrf.mxu0
        %v1164 = vadd.f32 %v679, %v1163
        %v1165 = vpop.f32.mrf.mxu0
        %v1166 = vadd.f32 %v683, %v1165
        %v1167 = vpop.f32.mrf.mxu0
        %v1168 = vadd.f32 %v679, %v1167
        %v1169 = vpop.f32.mrf.mxu0
        %v1170 = vadd.f32 %v683, %v1169
        %1171 = vdwg.mxu0
        %1172 = vmatprep.subr.bf16.mxu0 0
        %1173 = vmatpush1.bf16.msra.mxu0 %v794
        %1174 = vmatprep.subr.bf16.mxu0 0
        %1175 = vmatpush1.bf16.msra.mxu0 %v791
        %1176 = vmatprep.subr.bf16.mxu0 0
        %1177 = vmatpush1.bf16.msra.mxu0 %v788
        %1178 = vmatprep.subr.bf16.mxu0 0
        %1179 = vmatpush1.bf16.msra.mxu0 %v785
        %1180 = vmatprep.subr.bf16.mxu0 0
        %1181 = vmatpush1.bf16.msra.mxu0 %v782
        %1182 = vmatprep.subr.bf16.mxu0 0
        %1183 = vmatpush1.bf16.msra.mxu0 %v779
        %1184 = vmatprep.subr.bf16.mxu0 0
        %1185 = vmatpush1.bf16.msra.mxu0 %v776
        %1186 = vmatprep.subr.bf16.mxu0 0
        %1187 = vmatpush1.bf16.msra.mxu0 %v773
        %1188 = vmatprep.subr.bf16.mxu0 0
        %1189 = vmatpush2.bf16.msra.mxu0 0
        %1190 = vmatprep.subr.bf16.mxu0 0
        %1191 = vmatpush2.bf16.msra.mxu0 0
        %1192 = vmatprep.subr.bf16.mxu0 0
        %1193 = vmatpush2.bf16.msra.mxu0 0
        %1194 = vmatprep.subr.bf16.mxu0 0
        %1195 = vmatpush2.bf16.msra.mxu0 0
        %1196 = vmatprep.subr.bf16.mxu0 0
        %1197 = vmatpush2.bf16.msra.mxu0 0
        %1198 = vmatprep.subr.bf16.mxu0 0
        %1199 = vmatpush2.bf16.msra.mxu0 0
        %1200 = vmatprep.subr.bf16.mxu0 0
        %1201 = vmatpush2.bf16.msra.mxu0 0
        %1202 = vmatprep.subr.bf16.mxu0 0
        %1203 = vmatpush2.bf16.msra.mxu0 0
        %1204 = vmatprep.mubr.bf16.mxu0 0
        %1205 = vmatmul.mubr.bf16.gmra.mxu0 %v610
        %v1206 = vpop.f32.mrf.mxu0
        %v1207 = vadd.f32 %v687, %v1206
        %v1208 = vpop.f32.mrf.mxu0
        %v1209 = vpop.f32.mrf.mxu0
        %v1210 = vadd.f32 %v687, %v1209
        %v1211 = vpop.f32.mrf.mxu0
        %1212 = vmatprep.mubr.bf16.mxu0 0
        %1213 = vmatmul.mubr.bf16.gmra.mxu0 %v611
        %v1214 = vpop.f32.mrf.mxu0
        %v1215 = vadd.f32 %v687, %v1214
        %v1216 = vpop.f32.mrf.mxu0
        %v1217 = vpop.f32.mrf.mxu0
        %v1218 = vadd.f32 %v687, %v1217
        %v1219 = vpop.f32.mrf.mxu0
        %1220 = vmatprep.mubr.bf16.mxu0 0
        %1221 = vmatmul.mubr.bf16.gmra.mxu0 %v612
        %v1222 = vpop.f32.mrf.mxu0
        %v1223 = vadd.f32 %v687, %v1222
        %v1224 = vpop.f32.mrf.mxu0
        %v1225 = vpop.f32.mrf.mxu0
        %v1226 = vadd.f32 %v687, %v1225
        %v1227 = vpop.f32.mrf.mxu0
        %1228 = vmatprep.mubr.bf16.mxu0 0
        %1229 = vmatmul.mubr.bf16.gmra.mxu0 %v613
        %v1230 = vpop.f32.mrf.mxu0
        %v1231 = vadd.f32 %v687, %v1230
        %v1232 = vpop.f32.mrf.mxu0
        %v1233 = vpop.f32.mrf.mxu0
        %v1234 = vadd.f32 %v687, %v1233
        %v1235 = vpop.f32.mrf.mxu0
        %1236 = vmatprep.mubr.bf16.mxu0 0
        %1237 = vmatmul.mubr.bf16.gmra.mxu0 %v614
        %v1238 = vpop.f32.mrf.mxu0
        %v1239 = vadd.f32 %v687, %v1238
        %v1240 = vpop.f32.mrf.mxu0
        %v1241 = vpop.f32.mrf.mxu0
        %v1242 = vadd.f32 %v687, %v1241
        %v1243 = vpop.f32.mrf.mxu0
        %1244 = vmatprep.mubr.bf16.mxu0 0
        %1245 = vmatmul.mubr.bf16.gmra.mxu0 %v615
        %v1246 = vpop.f32.mrf.mxu0
        %v1247 = vadd.f32 %v687, %v1246
        %v1248 = vpop.f32.mrf.mxu0
        %v1249 = vpop.f32.mrf.mxu0
        %v1250 = vadd.f32 %v687, %v1249
        %v1251 = vpop.f32.mrf.mxu0
        %1252 = vmatprep.mubr.bf16.mxu0 0
        %1253 = vmatmul.mubr.bf16.gmra.mxu0 %v616
        %v1254 = vpop.f32.mrf.mxu0
        %v1255 = vadd.f32 %v687, %v1254
        %v1256 = vpop.f32.mrf.mxu0
        %v1257 = vpop.f32.mrf.mxu0
        %v1258 = vadd.f32 %v687, %v1257
        %v1259 = vpop.f32.mrf.mxu0
        %1260 = vmatprep.mubr.bf16.mxu0 0
        %1261 = vmatmul.mubr.bf16.gmra.mxu0 %v617
        %v1262 = vpop.f32.mrf.mxu0
        %v1263 = vadd.f32 %v687, %v1262
        %v1264 = vpop.f32.mrf.mxu0
        %v1265 = vpop.f32.mrf.mxu0
        %v1266 = vadd.f32 %v687, %v1265
        %v1267 = vpop.f32.mrf.mxu0
        %1268 = vmatprep.mubr.bf16.mxu0 0
        %1269 = vmatmul.mubr.bf16.gmra.mxu0 %v618
        %v1270 = vpop.f32.mrf.mxu0
        %v1271 = vadd.f32 %v687, %v1270
        %v1272 = vpop.f32.mrf.mxu0
        %v1273 = vpop.f32.mrf.mxu0
        %v1274 = vadd.f32 %v687, %v1273
        %v1275 = vpop.f32.mrf.mxu0
        %1276 = vmatprep.mubr.bf16.mxu0 0
        %1277 = vmatmul.mubr.bf16.gmra.mxu0 %v619
        %v1278 = vpop.f32.mrf.mxu0
        %v1279 = vadd.f32 %v687, %v1278
        %v1280 = vpop.f32.mrf.mxu0
        %v1281 = vpop.f32.mrf.mxu0
        %v1282 = vadd.f32 %v687, %v1281
        %v1283 = vpop.f32.mrf.mxu0
        %1284 = vmatprep.mubr.bf16.mxu0 0
        %1285 = vmatmul.mubr.bf16.gmra.mxu0 %v620
        %v1286 = vpop.f32.mrf.mxu0
        %v1287 = vadd.f32 %v687, %v1286
        %v1288 = vpop.f32.mrf.mxu0
        %v1289 = vpop.f32.mrf.mxu0
        %v1290 = vadd.f32 %v687, %v1289
        %v1291 = vpop.f32.mrf.mxu0
        %1292 = vmatprep.mubr.bf16.mxu0 0
        %1293 = vmatmul.mubr.bf16.gmra.mxu0 %v621
        %v1294 = vpop.f32.mrf.mxu0
        %v1295 = vadd.f32 %v687, %v1294
        %v1296 = vpop.f32.mrf.mxu0
        %v1297 = vpop.f32.mrf.mxu0
        %v1298 = vadd.f32 %v687, %v1297
        %v1299 = vpop.f32.mrf.mxu0
        %1300 = vmatprep.mubr.bf16.mxu0 0
        %1301 = vmatmul.mubr.bf16.gmra.mxu0 %v622
        %v1302 = vpop.f32.mrf.mxu0
        %v1303 = vadd.f32 %v687, %v1302
        %v1304 = vpop.f32.mrf.mxu0
        %v1305 = vpop.f32.mrf.mxu0
        %v1306 = vadd.f32 %v687, %v1305
        %v1307 = vpop.f32.mrf.mxu0
        %1308 = vmatprep.mubr.bf16.mxu0 0
        %1309 = vmatmul.mubr.bf16.gmra.mxu0 %v623
        %v1310 = vpop.f32.mrf.mxu0
        %v1311 = vadd.f32 %v687, %v1310
        %v1312 = vpop.f32.mrf.mxu0
        %v1313 = vpop.f32.mrf.mxu0
        %v1314 = vadd.f32 %v687, %v1313
        %v1315 = vpop.f32.mrf.mxu0
        %1316 = vmatprep.mubr.bf16.mxu0 0
        %1317 = vmatmul.mubr.bf16.gmra.mxu0 %v624
        %v1318 = vpop.f32.mrf.mxu0
        %v1319 = vadd.f32 %v687, %v1318
        %v1320 = vpop.f32.mrf.mxu0
        %v1321 = vpop.f32.mrf.mxu0
        %v1322 = vadd.f32 %v687, %v1321
        %v1323 = vpop.f32.mrf.mxu0
        %1324 = vmatprep.mubr.bf16.mxu0 0
        %1325 = vmatmul.mubr.bf16.gmra.mxu0 %v625
        %v1326 = vpop.f32.mrf.mxu0
        %v1327 = vadd.f32 %v687, %v1326
        %v1328 = vpop.f32.mrf.mxu0
        %v1329 = vpop.f32.mrf.mxu0
        %v1330 = vadd.f32 %v687, %v1329
        %v1331 = vpop.f32.mrf.mxu0
        %1332 = vmatprep.mubr.bf16.mxu0 0
        %1333 = vmatmul.mubr.bf16.gmra.mxu0 %v626
        %v1334 = vpop.f32.mrf.mxu0
        %v1335 = vadd.f32 %v687, %v1334
        %v1336 = vpop.f32.mrf.mxu0
        %v1337 = vpop.f32.mrf.mxu0
        %v1338 = vadd.f32 %v687, %v1337
        %v1339 = vpop.f32.mrf.mxu0
        %1340 = vmatprep.mubr.bf16.mxu0 0
        %1341 = vmatmul.mubr.bf16.gmra.mxu0 %v627
        %v1342 = vpop.f32.mrf.mxu0
        %v1343 = vadd.f32 %v687, %v1342
        %v1344 = vpop.f32.mrf.mxu0
        %v1345 = vpop.f32.mrf.mxu0
        %v1346 = vadd.f32 %v687, %v1345
        %v1347 = vpop.f32.mrf.mxu0
        %1348 = vmatprep.mubr.bf16.mxu0 0
        %1349 = vmatmul.mubr.bf16.gmra.mxu0 %v628
        %v1350 = vpop.f32.mrf.mxu0
        %v1351 = vadd.f32 %v687, %v1350
        %v1352 = vpop.f32.mrf.mxu0
        %v1353 = vpop.f32.mrf.mxu0
        %v1354 = vadd.f32 %v687, %v1353
        %v1355 = vpop.f32.mrf.mxu0
        %1356 = vmatprep.mubr.bf16.mxu0 0
        %1357 = vmatmul.mubr.bf16.gmra.mxu0 %v629
        %v1358 = vpop.f32.mrf.mxu0
        %v1359 = vadd.f32 %v687, %v1358
        %v1360 = vpop.f32.mrf.mxu0
        %v1361 = vpop.f32.mrf.mxu0
        %v1362 = vadd.f32 %v687, %v1361
        %v1363 = vpop.f32.mrf.mxu0
        %1364 = vmatprep.mubr.bf16.mxu0 0
        %1365 = vmatmul.mubr.bf16.gmra.mxu0 %v630
        %v1366 = vpop.f32.mrf.mxu0
        %v1367 = vadd.f32 %v687, %v1366
        %v1368 = vpop.f32.mrf.mxu0
        %v1369 = vpop.f32.mrf.mxu0
        %v1370 = vadd.f32 %v687, %v1369
        %v1371 = vpop.f32.mrf.mxu0
        %1372 = vmatprep.mubr.bf16.mxu0 0
        %1373 = vmatmul.mubr.bf16.gmra.mxu0 %v631
        %v1374 = vpop.f32.mrf.mxu0
        %v1375 = vadd.f32 %v687, %v1374
        %v1376 = vpop.f32.mrf.mxu0
        %v1377 = vpop.f32.mrf.mxu0
        %v1378 = vadd.f32 %v687, %v1377
        %v1379 = vpop.f32.mrf.mxu0
        %1380 = vmatprep.mubr.bf16.mxu0 0
        %1381 = vmatmul.mubr.bf16.gmra.mxu0 %v632
        %v1382 = vpop.f32.mrf.mxu0
        %v1383 = vadd.f32 %v687, %v1382
        %v1384 = vpop.f32.mrf.mxu0
        %v1385 = vpop.f32.mrf.mxu0
        %v1386 = vadd.f32 %v687, %v1385
        %v1387 = vpop.f32.mrf.mxu0
        %1388 = vmatprep.mubr.bf16.mxu0 0
        %1389 = vmatmul.mubr.bf16.gmra.mxu0 %v633
        %v1390 = vpop.f32.mrf.mxu0
        %v1391 = vadd.f32 %v687, %v1390
        %v1392 = vpop.f32.mrf.mxu0
        %v1393 = vpop.f32.mrf.mxu0
        %v1394 = vadd.f32 %v687, %v1393
        %v1395 = vpop.f32.mrf.mxu0
        %1396 = vmatprep.mubr.bf16.mxu0 0
        %1397 = vmatmul.mubr.bf16.gmra.mxu0 %v634
        %v1398 = vpop.f32.mrf.mxu0
        %v1399 = vadd.f32 %v687, %v1398
        %v1400 = vpop.f32.mrf.mxu0
        %v1401 = vpop.f32.mrf.mxu0
        %v1402 = vadd.f32 %v687, %v1401
        %v1403 = vpop.f32.mrf.mxu0
        %1404 = vmatprep.mubr.bf16.mxu0 0
        %1405 = vmatmul.mubr.bf16.gmra.mxu0 %v635
        %v1406 = vpop.f32.mrf.mxu0
        %v1407 = vadd.f32 %v687, %v1406
        %v1408 = vpop.f32.mrf.mxu0
        %v1409 = vpop.f32.mrf.mxu0
        %v1410 = vadd.f32 %v687, %v1409
        %v1411 = vpop.f32.mrf.mxu0
        %1412 = vmatprep.mubr.bf16.mxu0 0
        %1413 = vmatmul.mubr.bf16.gmra.mxu0 %v636
        %v1414 = vpop.f32.mrf.mxu0
        %v1415 = vadd.f32 %v687, %v1414
        %v1416 = vpop.f32.mrf.mxu0
        %v1417 = vpop.f32.mrf.mxu0
        %v1418 = vadd.f32 %v687, %v1417
        %v1419 = vpop.f32.mrf.mxu0
        %1420 = vmatprep.mubr.bf16.mxu0 0
        %1421 = vmatmul.mubr.bf16.gmra.mxu0 %v637
        %v1422 = vpop.f32.mrf.mxu0
        %v1423 = vadd.f32 %v687, %v1422
        %v1424 = vpop.f32.mrf.mxu0
        %v1425 = vpop.f32.mrf.mxu0
        %v1426 = vadd.f32 %v687, %v1425
        %v1427 = vpop.f32.mrf.mxu0
        %1428 = vmatprep.mubr.bf16.mxu0 0
        %1429 = vmatmul.mubr.bf16.gmra.mxu0 %v638
        %v1430 = vpop.f32.mrf.mxu0
        %v1431 = vadd.f32 %v687, %v1430
        %v1432 = vpop.f32.mrf.mxu0
        %v1433 = vpop.f32.mrf.mxu0
        %v1434 = vadd.f32 %v687, %v1433
        %v1435 = vpop.f32.mrf.mxu0
        %1436 = vmatprep.mubr.bf16.mxu0 0
        %1437 = vmatmul.mubr.bf16.gmra.mxu0 %v639
        %v1438 = vpop.f32.mrf.mxu0
        %v1439 = vadd.f32 %v687, %v1438
        %v1440 = vpop.f32.mrf.mxu0
        %v1441 = vpop.f32.mrf.mxu0
        %v1442 = vadd.f32 %v687, %v1441
        %v1443 = vpop.f32.mrf.mxu0
        %1444 = vmatprep.mubr.bf16.mxu0 0
        %1445 = vmatmul.mubr.bf16.gmra.mxu0 %v640
        %v1446 = vpop.f32.mrf.mxu0
        %v1447 = vadd.f32 %v687, %v1446
        %v1448 = vpop.f32.mrf.mxu0
        %v1449 = vpop.f32.mrf.mxu0
        %v1450 = vadd.f32 %v687, %v1449
        %v1451 = vpop.f32.mrf.mxu0
        %1452 = vmatprep.mubr.bf16.mxu0 0
        %1453 = vmatmul.mubr.bf16.gmra.mxu0 %v641
        %v1454 = vpop.f32.mrf.mxu0
        %v1455 = vadd.f32 %v687, %v1454
        %v1456 = vpop.f32.mrf.mxu0
        %v1457 = vpop.f32.mrf.mxu0
        %v1458 = vadd.f32 %v687, %v1457
        %v1459 = vpop.f32.mrf.mxu0
        %1460 = vdwg.mxu0
        %v1461 = vpack.c.bf16 %v858, %v854
        %v1462 = vpack.c.bf16 %v868, %v864
        %v1463 = vpack.c.bf16 %v878, %v874
        %v1464 = vpack.c.bf16 %v888, %v884
        %v1465 = vpack.c.bf16 %v898, %v894
        %v1466 = vpack.c.bf16 %v908, %v904
        %v1467 = vpack.c.bf16 %v918, %v914
        %v1468 = vpack.c.bf16 %v928, %v924
        %v1469 = vpack.c.bf16 %v938, %v934
        %v1470 = vpack.c.bf16 %v948, %v944
        %v1471 = vpack.c.bf16 %v958, %v954
        %v1472 = vpack.c.bf16 %v968, %v964
        %v1473 = vpack.c.bf16 %v978, %v974
        %v1474 = vpack.c.bf16 %v988, %v984
        %v1475 = vpack.c.bf16 %v998, %v994
        %v1476 = vpack.c.bf16 %v1008, %v1004
        %v1477 = vpack.c.bf16 %v1018, %v1014
        %v1478 = vpack.c.bf16 %v1028, %v1024
        %v1479 = vpack.c.bf16 %v1038, %v1034
        %v1480 = vpack.c.bf16 %v1048, %v1044
        %v1481 = vpack.c.bf16 %v1058, %v1054
        %v1482 = vpack.c.bf16 %v1068, %v1064
        %v1483 = vpack.c.bf16 %v1078, %v1074
        %v1484 = vpack.c.bf16 %v1088, %v1084
        %v1485 = vpack.c.bf16 %v1098, %v1094
        %v1486 = vpack.c.bf16 %v1108, %v1104
        %v1487 = vpack.c.bf16 %v1118, %v1114
        %v1488 = vpack.c.bf16 %v1128, %v1124
        %v1489 = vpack.c.bf16 %v1138, %v1134
        %v1490 = vpack.c.bf16 %v1148, %v1144
        %v1491 = vpack.c.bf16 %v1158, %v1154
        %v1492 = vpack.c.bf16 %v1168, %v1164
        %v1525 = vunpack.c.l.b16 %v1461
        %v1526 = vunpack.c.h.b16 %v1461
        %v1527 = vunpack.c.l.b16 %v1462
        %v1528 = vunpack.c.h.b16 %v1462
        %v1529 = vunpack.c.l.b16 %v1463
        %v1530 = vunpack.c.h.b16 %v1463
        %v1531 = vunpack.c.l.b16 %v1464
        %v1532 = vunpack.c.h.b16 %v1464
        %v1533 = vunpack.c.l.b16 %v1465
        %v1534 = vunpack.c.h.b16 %v1465
        %v1535 = vunpack.c.l.b16 %v1466
        %v1536 = vunpack.c.h.b16 %v1466
        %v1537 = vunpack.c.l.b16 %v1467
        %v1538 = vunpack.c.h.b16 %v1467
        %v1539 = vunpack.c.l.b16 %v1468
        %v1540 = vunpack.c.h.b16 %v1468
        %v1541 = vunpack.c.l.b16 %v1469
        %v1542 = vunpack.c.h.b16 %v1469
        %v1543 = vunpack.c.l.b16 %v1470
        %v1544 = vunpack.c.h.b16 %v1470
        %v1545 = vunpack.c.l.b16 %v1471
        %v1546 = vunpack.c.h.b16 %v1471
        %v1547 = vunpack.c.l.b16 %v1472
        %v1548 = vunpack.c.h.b16 %v1472
        %v1549 = vunpack.c.l.b16 %v1473
        %v1550 = vunpack.c.h.b16 %v1473
        %v1551 = vunpack.c.l.b16 %v1474
        %v1552 = vunpack.c.h.b16 %v1474
        %v1553 = vunpack.c.l.b16 %v1475
        %v1554 = vunpack.c.h.b16 %v1475
        %v1555 = vunpack.c.l.b16 %v1476
        %v1556 = vunpack.c.h.b16 %v1476
        %v1557 = vunpack.c.l.b16 %v1477
        %v1558 = vunpack.c.h.b16 %v1477
        %v1559 = vunpack.c.l.b16 %v1478
        %v1560 = vunpack.c.h.b16 %v1478
        %v1561 = vunpack.c.l.b16 %v1479
        %v1562 = vunpack.c.h.b16 %v1479
        %v1563 = vunpack.c.l.b16 %v1480
        %v1564 = vunpack.c.h.b16 %v1480
        %v1565 = vunpack.c.l.b16 %v1481
        %v1566 = vunpack.c.h.b16 %v1481
        %v1567 = vunpack.c.l.b16 %v1482
        %v1568 = vunpack.c.h.b16 %v1482
        %v1569 = vunpack.c.l.b16 %v1483
        %v1570 = vunpack.c.h.b16 %v1483
        %v1571 = vunpack.c.l.b16 %v1484
        %v1572 = vunpack.c.h.b16 %v1484
        %v1573 = vunpack.c.l.b16 %v1485
        %v1574 = vunpack.c.h.b16 %v1485
        %v1575 = vunpack.c.l.b16 %v1486
        %v1576 = vunpack.c.h.b16 %v1486
        %v1577 = vunpack.c.l.b16 %v1487
        %v1578 = vunpack.c.h.b16 %v1487
        %v1579 = vunpack.c.l.b16 %v1488
        %v1580 = vunpack.c.h.b16 %v1488
        %v1581 = vunpack.c.l.b16 %v1489
        %v1582 = vunpack.c.h.b16 %v1489
        %v1583 = vunpack.c.l.b16 %v1490
        %v1584 = vunpack.c.h.b16 %v1490
        %v1585 = vunpack.c.l.b16 %v1491
        %v1586 = vunpack.c.h.b16 %v1491
        %v1587 = vunpack.c.l.b16 %v1492
        %v1588 = vunpack.c.h.b16 %v1492
        %v1589 = vpack.c.b16 %v1525, %v1525
        %v1590 = vpack.c.b16 %v1526, %v1526
        %v1591 = vpack.c.b16 %v1527, %v1527
        %v1592 = vpack.c.b16 %v1528, %v1528
        %v1593 = vpack.c.b16 %v1529, %v1529
        %v1594 = vpack.c.b16 %v1530, %v1530
        %v1595 = vpack.c.b16 %v1531, %v1531
        %v1596 = vpack.c.b16 %v1532, %v1532
        %v1597 = vpack.c.b16 %v1533, %v1533
        %v1598 = vpack.c.b16 %v1534, %v1534
        %v1599 = vpack.c.b16 %v1535, %v1535
        %v1600 = vpack.c.b16 %v1536, %v1536
        %v1601 = vpack.c.b16 %v1537, %v1537
        %v1602 = vpack.c.b16 %v1538, %v1538
        %v1603 = vpack.c.b16 %v1539, %v1539
        %v1604 = vpack.c.b16 %v1540, %v1540
        %v1605 = vpack.c.b16 %v1541, %v1541
        %v1606 = vpack.c.b16 %v1542, %v1542
        %v1607 = vpack.c.b16 %v1543, %v1543
        %v1608 = vpack.c.b16 %v1544, %v1544
        %v1609 = vpack.c.b16 %v1545, %v1545
        %v1610 = vpack.c.b16 %v1546, %v1546
        %v1611 = vpack.c.b16 %v1547, %v1547
        %v1612 = vpack.c.b16 %v1548, %v1548
        %v1613 = vpack.c.b16 %v1549, %v1549
        %v1614 = vpack.c.b16 %v1550, %v1550
        %v1615 = vpack.c.b16 %v1551, %v1551
        %v1616 = vpack.c.b16 %v1552, %v1552
        %v1617 = vpack.c.b16 %v1553, %v1553
        %v1618 = vpack.c.b16 %v1554, %v1554
        %v1619 = vpack.c.b16 %v1555, %v1555
        %v1620 = vpack.c.b16 %v1556, %v1556
        %v1621 = vpack.c.b16 %v1557, %v1557
        %v1622 = vpack.c.b16 %v1558, %v1558
        %v1623 = vpack.c.b16 %v1559, %v1559
        %v1624 = vpack.c.b16 %v1560, %v1560
        %v1625 = vpack.c.b16 %v1561, %v1561
        %v1626 = vpack.c.b16 %v1562, %v1562
        %v1627 = vpack.c.b16 %v1563, %v1563
        %v1628 = vpack.c.b16 %v1564, %v1564
        %v1629 = vpack.c.b16 %v1565, %v1565
        %v1630 = vpack.c.b16 %v1566, %v1566
        %v1631 = vpack.c.b16 %v1567, %v1567
        %v1632 = vpack.c.b16 %v1568, %v1568
        %v1633 = vpack.c.b16 %v1569, %v1569
        %v1634 = vpack.c.b16 %v1570, %v1570
        %v1635 = vpack.c.b16 %v1571, %v1571
        %v1636 = vpack.c.b16 %v1572, %v1572
        %v1637 = vpack.c.b16 %v1573, %v1573
        %v1638 = vpack.c.b16 %v1574, %v1574
        %v1639 = vpack.c.b16 %v1575, %v1575
        %v1640 = vpack.c.b16 %v1576, %v1576
        %v1641 = vpack.c.b16 %v1577, %v1577
        %v1642 = vpack.c.b16 %v1578, %v1578
        %v1643 = vpack.c.b16 %v1579, %v1579
        %v1644 = vpack.c.b16 %v1580, %v1580
        %v1645 = vpack.c.b16 %v1581, %v1581
        %v1646 = vpack.c.b16 %v1582, %v1582
        %v1647 = vpack.c.b16 %v1583, %v1583
        %v1648 = vpack.c.b16 %v1584, %v1584
        %v1649 = vpack.c.b16 %v1585, %v1585
        %v1650 = vpack.c.b16 %v1586, %v1586
        %v1651 = vpack.c.b16 %v1587, %v1587
        %v1652 = vpack.c.b16 %v1588, %v1588
        %1717 = vst [vmem:[%s381] sm:$0xf] %v1589
        %1718 = vst [vmem:[%s381 + $0x4] sm:$0xf] %v1590
        %1719 = vst [vmem:[%s381 + $0x8] sm:$0xf] %v1591
        %1720 = vst [vmem:[%s381 + $0xc] sm:$0xf] %v1592
        %1721 = vst [vmem:[%s381 + $0x10] sm:$0xf] %v1593
        %1722 = vst [vmem:[%s381 + $0x14] sm:$0xf] %v1594
        %1723 = vst [vmem:[%s381 + $0x18] sm:$0xf] %v1595
        %1724 = vst [vmem:[%s381 + $0x1c] sm:$0xf] %v1596
        %1725 = vst [vmem:[%s381 + $0x20] sm:$0xf] %v1597
        %1726 = vst [vmem:[%s381 + $0x24] sm:$0xf] %v1598
        %1727 = vst [vmem:[%s381 + $0x28] sm:$0xf] %v1599
        %1728 = vst [vmem:[%s381 + $0x2c] sm:$0xf] %v1600
        %1729 = vst [vmem:[%s381 + $0x30] sm:$0xf] %v1601
        %1730 = vst [vmem:[%s381 + $0x34] sm:$0xf] %v1602
        %1731 = vst [vmem:[%s381 + $0x38] sm:$0xf] %v1603
        %1732 = vst [vmem:[%s381 + $0x3c] sm:$0xf] %v1604
        %1733 = vst [vmem:[%s381 + $0x40] sm:$0xf] %v1605
        %1734 = vst [vmem:[%s381 + $0x44] sm:$0xf] %v1606
        %1735 = vst [vmem:[%s381 + $0x48] sm:$0xf] %v1607
        %1736 = vst [vmem:[%s381 + $0x4c] sm:$0xf] %v1608
        %1737 = vst [vmem:[%s381 + $0x50] sm:$0xf] %v1609
        %1738 = vst [vmem:[%s381 + $0x54] sm:$0xf] %v1610
        %1739 = vst [vmem:[%s381 + $0x58] sm:$0xf] %v1611
        %1740 = vst [vmem:[%s381 + $0x5c] sm:$0xf] %v1612
        %1741 = vst [vmem:[%s381 + $0x60] sm:$0xf] %v1613
        %1742 = vst [vmem:[%s381 + $0x64] sm:$0xf] %v1614
        %1743 = vst [vmem:[%s381 + $0x68] sm:$0xf] %v1615
        %1744 = vst [vmem:[%s381 + $0x6c] sm:$0xf] %v1616
        %1745 = vst [vmem:[%s381 + $0x70] sm:$0xf] %v1617
        %1746 = vst [vmem:[%s381 + $0x74] sm:$0xf] %v1618
        %1747 = vst [vmem:[%s381 + $0x78] sm:$0xf] %v1619
        %1748 = vst [vmem:[%s381 + $0x7c] sm:$0xf] %v1620
        %1749 = vst [vmem:[%s381 + $0x80] sm:$0xf] %v1621
        %1750 = vst [vmem:[%s381 + $0x84] sm:$0xf] %v1622
        %1751 = vst [vmem:[%s381 + $0x88] sm:$0xf] %v1623
        %1752 = vst [vmem:[%s381 + $0x8c] sm:$0xf] %v1624
        %1753 = vst [vmem:[%s381 + $0x90] sm:$0xf] %v1625
        %1754 = vst [vmem:[%s381 + $0x94] sm:$0xf] %v1626
        %1755 = vst [vmem:[%s381 + $0x98] sm:$0xf] %v1627
        %1756 = vst [vmem:[%s381 + $0x9c] sm:$0xf] %v1628
        %1757 = vst [vmem:[%s381 + $0xa0] sm:$0xf] %v1629
        %1758 = vst [vmem:[%s381 + $0xa4] sm:$0xf] %v1630
        %1759 = vst [vmem:[%s381 + $0xa8] sm:$0xf] %v1631
        %1760 = vst [vmem:[%s381 + $0xac] sm:$0xf] %v1632
        %1761 = vst [vmem:[%s381 + $0xb0] sm:$0xf] %v1633
        %1762 = vst [vmem:[%s381 + $0xb4] sm:$0xf] %v1634
        %1763 = vst [vmem:[%s381 + $0xb8] sm:$0xf] %v1635
        %1764 = vst [vmem:[%s381 + $0xbc] sm:$0xf] %v1636
        %1765 = vst [vmem:[%s381 + $0xc0] sm:$0xf] %v1637
        %1766 = vst [vmem:[%s381 + $0xc4] sm:$0xf] %v1638
        %1767 = vst [vmem:[%s381 + $0xc8] sm:$0xf] %v1639
        %1768 = vst [vmem:[%s381 + $0xcc] sm:$0xf] %v1640
        %1769 = vst [vmem:[%s381 + $0xd0] sm:$0xf] %v1641
        %1770 = vst [vmem:[%s381 + $0xd4] sm:$0xf] %v1642
        %1771 = vst [vmem:[%s381 + $0xd8] sm:$0xf] %v1643
        %1772 = vst [vmem:[%s381 + $0xdc] sm:$0xf] %v1644
        %1773 = vst [vmem:[%s381 + $0xe0] sm:$0xf] %v1645
        %1774 = vst [vmem:[%s381 + $0xe4] sm:$0xf] %v1646
        %1775 = vst [vmem:[%s381 + $0xe8] sm:$0xf] %v1647
        %1776 = vst [vmem:[%s381 + $0xec] sm:$0xf] %v1648
        %1777 = vst [vmem:[%s381 + $0xf0] sm:$0xf] %v1649
        %1778 = vst [vmem:[%s381 + $0xf4] sm:$0xf] %v1650
        %1779 = vst [vmem:[%s381 + $0xf8] sm:$0xf] %v1651
        %1780 = vst [vmem:[%s381 + $0xfc] sm:$0xf] %v1652
        %v1781 = vpack.c.bf16 %v860, %v856
        %v1782 = vpack.c.bf16 %v870, %v866
        %v1783 = vpack.c.bf16 %v880, %v876
        %v1784 = vpack.c.bf16 %v890, %v886
        %v1785 = vpack.c.bf16 %v900, %v896
        %v1786 = vpack.c.bf16 %v910, %v906
        %v1787 = vpack.c.bf16 %v920, %v916
        %v1788 = vpack.c.bf16 %v930, %v926
        %v1789 = vpack.c.bf16 %v940, %v936
        %v1790 = vpack.c.bf16 %v950, %v946
        %v1791 = vpack.c.bf16 %v960, %v956
        %v1792 = vpack.c.bf16 %v970, %v966
        %v1793 = vpack.c.bf16 %v980, %v976
        %v1794 = vpack.c.bf16 %v990, %v986
        %v1795 = vpack.c.bf16 %v1000, %v996
        %v1796 = vpack.c.bf16 %v1010, %v1006
        %v1797 = vpack.c.bf16 %v1020, %v1016
        %v1798 = vpack.c.bf16 %v1030, %v1026
        %v1799 = vpack.c.bf16 %v1040, %v1036
        %v1800 = vpack.c.bf16 %v1050, %v1046
        %v1801 = vpack.c.bf16 %v1060, %v1056
        %v1802 = vpack.c.bf16 %v1070, %v1066
        %v1803 = vpack.c.bf16 %v1080, %v1076
        %v1804 = vpack.c.bf16 %v1090, %v1086
        %v1805 = vpack.c.bf16 %v1100, %v1096
        %v1806 = vpack.c.bf16 %v1110, %v1106
        %v1807 = vpack.c.bf16 %v1120, %v1116
        %v1808 = vpack.c.bf16 %v1130, %v1126
        %v1809 = vpack.c.bf16 %v1140, %v1136
        %v1810 = vpack.c.bf16 %v1150, %v1146
        %v1811 = vpack.c.bf16 %v1160, %v1156
        %v1812 = vpack.c.bf16 %v1170, %v1166
        %v1845 = vunpack.c.l.b16 %v1781
        %v1846 = vunpack.c.h.b16 %v1781
        %v1847 = vunpack.c.l.b16 %v1782
        %v1848 = vunpack.c.h.b16 %v1782
        %v1849 = vunpack.c.l.b16 %v1783
        %v1850 = vunpack.c.h.b16 %v1783
        %v1851 = vunpack.c.l.b16 %v1784
        %v1852 = vunpack.c.h.b16 %v1784
        %v1853 = vunpack.c.l.b16 %v1785
        %v1854 = vunpack.c.h.b16 %v1785
        %v1855 = vunpack.c.l.b16 %v1786
        %v1856 = vunpack.c.h.b16 %v1786
        %v1857 = vunpack.c.l.b16 %v1787
        %v1858 = vunpack.c.h.b16 %v1787
        %v1859 = vunpack.c.l.b16 %v1788
        %v1860 = vunpack.c.h.b16 %v1788
        %v1861 = vunpack.c.l.b16 %v1789
        %v1862 = vunpack.c.h.b16 %v1789
        %v1863 = vunpack.c.l.b16 %v1790
        %v1864 = vunpack.c.h.b16 %v1790
        %v1865 = vunpack.c.l.b16 %v1791
        %v1866 = vunpack.c.h.b16 %v1791
        %v1867 = vunpack.c.l.b16 %v1792
        %v1868 = vunpack.c.h.b16 %v1792
        %v1869 = vunpack.c.l.b16 %v1793
        %v1870 = vunpack.c.h.b16 %v1793
        %v1871 = vunpack.c.l.b16 %v1794
        %v1872 = vunpack.c.h.b16 %v1794
        %v1873 = vunpack.c.l.b16 %v1795
        %v1874 = vunpack.c.h.b16 %v1795
        %v1875 = vunpack.c.l.b16 %v1796
        %v1876 = vunpack.c.h.b16 %v1796
        %v1877 = vunpack.c.l.b16 %v1797
        %v1878 = vunpack.c.h.b16 %v1797
        %v1879 = vunpack.c.l.b16 %v1798
        %v1880 = vunpack.c.h.b16 %v1798
        %v1881 = vunpack.c.l.b16 %v1799
        %v1882 = vunpack.c.h.b16 %v1799
        %v1883 = vunpack.c.l.b16 %v1800
        %v1884 = vunpack.c.h.b16 %v1800
        %v1885 = vunpack.c.l.b16 %v1801
        %v1886 = vunpack.c.h.b16 %v1801
        %v1887 = vunpack.c.l.b16 %v1802
        %v1888 = vunpack.c.h.b16 %v1802
        %v1889 = vunpack.c.l.b16 %v1803
        %v1890 = vunpack.c.h.b16 %v1803
        %v1891 = vunpack.c.l.b16 %v1804
        %v1892 = vunpack.c.h.b16 %v1804
        %v1893 = vunpack.c.l.b16 %v1805
        %v1894 = vunpack.c.h.b16 %v1805
        %v1895 = vunpack.c.l.b16 %v1806
        %v1896 = vunpack.c.h.b16 %v1806
        %v1897 = vunpack.c.l.b16 %v1807
        %v1898 = vunpack.c.h.b16 %v1807
        %v1899 = vunpack.c.l.b16 %v1808
        %v1900 = vunpack.c.h.b16 %v1808
        %v1901 = vunpack.c.l.b16 %v1809
        %v1902 = vunpack.c.h.b16 %v1809
        %v1903 = vunpack.c.l.b16 %v1810
        %v1904 = vunpack.c.h.b16 %v1810
        %v1905 = vunpack.c.l.b16 %v1811
        %v1906 = vunpack.c.h.b16 %v1811
        %v1907 = vunpack.c.l.b16 %v1812
        %v1908 = vunpack.c.h.b16 %v1812
        %v1909 = vpack.c.b16 %v1845, %v1845
        %v1910 = vpack.c.b16 %v1846, %v1846
        %v1911 = vpack.c.b16 %v1847, %v1847
        %v1912 = vpack.c.b16 %v1848, %v1848
        %v1913 = vpack.c.b16 %v1849, %v1849
        %v1914 = vpack.c.b16 %v1850, %v1850
        %v1915 = vpack.c.b16 %v1851, %v1851
        %v1916 = vpack.c.b16 %v1852, %v1852
        %v1917 = vpack.c.b16 %v1853, %v1853
        %v1918 = vpack.c.b16 %v1854, %v1854
        %v1919 = vpack.c.b16 %v1855, %v1855
        %v1920 = vpack.c.b16 %v1856, %v1856
        %v1921 = vpack.c.b16 %v1857, %v1857
        %v1922 = vpack.c.b16 %v1858, %v1858
        %v1923 = vpack.c.b16 %v1859, %v1859
        %v1924 = vpack.c.b16 %v1860, %v1860
        %v1925 = vpack.c.b16 %v1861, %v1861
        %v1926 = vpack.c.b16 %v1862, %v1862
        %v1927 = vpack.c.b16 %v1863, %v1863
        %v1928 = vpack.c.b16 %v1864, %v1864
        %v1929 = vpack.c.b16 %v1865, %v1865
        %v1930 = vpack.c.b16 %v1866, %v1866
        %v1931 = vpack.c.b16 %v1867, %v1867
        %v1932 = vpack.c.b16 %v1868, %v1868
        %v1933 = vpack.c.b16 %v1869, %v1869
        %v1934 = vpack.c.b16 %v1870, %v1870
        %v1935 = vpack.c.b16 %v1871, %v1871
        %v1936 = vpack.c.b16 %v1872, %v1872
        %v1937 = vpack.c.b16 %v1873, %v1873
        %v1938 = vpack.c.b16 %v1874, %v1874
        %v1939 = vpack.c.b16 %v1875, %v1875
        %v1940 = vpack.c.b16 %v1876, %v1876
        %v1941 = vpack.c.b16 %v1877, %v1877
        %v1942 = vpack.c.b16 %v1878, %v1878
        %v1943 = vpack.c.b16 %v1879, %v1879
        %v1944 = vpack.c.b16 %v1880, %v1880
        %v1945 = vpack.c.b16 %v1881, %v1881
        %v1946 = vpack.c.b16 %v1882, %v1882
        %v1947 = vpack.c.b16 %v1883, %v1883
        %v1948 = vpack.c.b16 %v1884, %v1884
        %v1949 = vpack.c.b16 %v1885, %v1885
        %v1950 = vpack.c.b16 %v1886, %v1886
        %v1951 = vpack.c.b16 %v1887, %v1887
        %v1952 = vpack.c.b16 %v1888, %v1888
        %v1953 = vpack.c.b16 %v1889, %v1889
        %v1954 = vpack.c.b16 %v1890, %v1890
        %v1955 = vpack.c.b16 %v1891, %v1891
        %v1956 = vpack.c.b16 %v1892, %v1892
        %v1957 = vpack.c.b16 %v1893, %v1893
        %v1958 = vpack.c.b16 %v1894, %v1894
        %v1959 = vpack.c.b16 %v1895, %v1895
        %v1960 = vpack.c.b16 %v1896, %v1896
        %v1961 = vpack.c.b16 %v1897, %v1897
        %v1962 = vpack.c.b16 %v1898, %v1898
        %v1963 = vpack.c.b16 %v1899, %v1899
        %v1964 = vpack.c.b16 %v1900, %v1900
        %v1965 = vpack.c.b16 %v1901, %v1901
        %v1966 = vpack.c.b16 %v1902, %v1902
        %v1967 = vpack.c.b16 %v1903, %v1903
        %v1968 = vpack.c.b16 %v1904, %v1904
        %v1969 = vpack.c.b16 %v1905, %v1905
        %v1970 = vpack.c.b16 %v1906, %v1906
        %v1971 = vpack.c.b16 %v1907, %v1907
        %v1972 = vpack.c.b16 %v1908, %v1908
        %2037 = vst [vmem:[%s388] sm:$0xf] %v1909
        %2038 = vst [vmem:[%s388 + $0x4] sm:$0xf] %v1910
        %2039 = vst [vmem:[%s388 + $0x8] sm:$0xf] %v1911
        %2040 = vst [vmem:[%s388 + $0xc] sm:$0xf] %v1912
        %2041 = vst [vmem:[%s388 + $0x10] sm:$0xf] %v1913
        %2042 = vst [vmem:[%s388 + $0x14] sm:$0xf] %v1914
        %2043 = vst [vmem:[%s388 + $0x18] sm:$0xf] %v1915
        %2044 = vst [vmem:[%s388 + $0x1c] sm:$0xf] %v1916
        %2045 = vst [vmem:[%s388 + $0x20] sm:$0xf] %v1917
        %2046 = vst [vmem:[%s388 + $0x24] sm:$0xf] %v1918
        %2047 = vst [vmem:[%s388 + $0x28] sm:$0xf] %v1919
        %2048 = vst [vmem:[%s388 + $0x2c] sm:$0xf] %v1920
        %2049 = vst [vmem:[%s388 + $0x30] sm:$0xf] %v1921
        %2050 = vst [vmem:[%s388 + $0x34] sm:$0xf] %v1922
        %2051 = vst [vmem:[%s388 + $0x38] sm:$0xf] %v1923
        %2052 = vst [vmem:[%s388 + $0x3c] sm:$0xf] %v1924
        %2053 = vst [vmem:[%s388 + $0x40] sm:$0xf] %v1925
        %2054 = vst [vmem:[%s388 + $0x44] sm:$0xf] %v1926
        %2055 = vst [vmem:[%s388 + $0x48] sm:$0xf] %v1927
        %2056 = vst [vmem:[%s388 + $0x4c] sm:$0xf] %v1928
        %2057 = vst [vmem:[%s388 + $0x50] sm:$0xf] %v1929
        %2058 = vst [vmem:[%s388 + $0x54] sm:$0xf] %v1930
        %2059 = vst [vmem:[%s388 + $0x58] sm:$0xf] %v1931
        %2060 = vst [vmem:[%s388 + $0x5c] sm:$0xf] %v1932
        %2061 = vst [vmem:[%s388 + $0x60] sm:$0xf] %v1933
        %2062 = vst [vmem:[%s388 + $0x64] sm:$0xf] %v1934
        %2063 = vst [vmem:[%s388 + $0x68] sm:$0xf] %v1935
        %2064 = vst [vmem:[%s388 + $0x6c] sm:$0xf] %v1936
        %2065 = vst [vmem:[%s388 + $0x70] sm:$0xf] %v1937
        %2066 = vst [vmem:[%s388 + $0x74] sm:$0xf] %v1938
        %2067 = vst [vmem:[%s388 + $0x78] sm:$0xf] %v1939
        %2068 = vst [vmem:[%s388 + $0x7c] sm:$0xf] %v1940
        %2069 = vst [vmem:[%s388 + $0x80] sm:$0xf] %v1941
        %2070 = vst [vmem:[%s388 + $0x84] sm:$0xf] %v1942
        %2071 = vst [vmem:[%s388 + $0x88] sm:$0xf] %v1943
        %2072 = vst [vmem:[%s388 + $0x8c] sm:$0xf] %v1944
        %2073 = vst [vmem:[%s388 + $0x90] sm:$0xf] %v1945
        %2074 = vst [vmem:[%s388 + $0x94] sm:$0xf] %v1946
        %2075 = vst [vmem:[%s388 + $0x98] sm:$0xf] %v1947
        %2076 = vst [vmem:[%s388 + $0x9c] sm:$0xf] %v1948
        %2077 = vst [vmem:[%s388 + $0xa0] sm:$0xf] %v1949
        %2078 = vst [vmem:[%s388 + $0xa4] sm:$0xf] %v1950
        %2079 = vst [vmem:[%s388 + $0xa8] sm:$0xf] %v1951
        %2080 = vst [vmem:[%s388 + $0xac] sm:$0xf] %v1952
        %2081 = vst [vmem:[%s388 + $0xb0] sm:$0xf] %v1953
        %2082 = vst [vmem:[%s388 + $0xb4] sm:$0xf] %v1954
        %2083 = vst [vmem:[%s388 + $0xb8] sm:$0xf] %v1955
        %2084 = vst [vmem:[%s388 + $0xbc] sm:$0xf] %v1956
        %2085 = vst [vmem:[%s388 + $0xc0] sm:$0xf] %v1957
        %2086 = vst [vmem:[%s388 + $0xc4] sm:$0xf] %v1958
        %2087 = vst [vmem:[%s388 + $0xc8] sm:$0xf] %v1959
        %2088 = vst [vmem:[%s388 + $0xcc] sm:$0xf] %v1960
        %2089 = vst [vmem:[%s388 + $0xd0] sm:$0xf] %v1961
        %2090 = vst [vmem:[%s388 + $0xd4] sm:$0xf] %v1962
        %2091 = vst [vmem:[%s388 + $0xd8] sm:$0xf] %v1963
        %2092 = vst [vmem:[%s388 + $0xdc] sm:$0xf] %v1964
        %2093 = vst [vmem:[%s388 + $0xe0] sm:$0xf] %v1965
        %2094 = vst [vmem:[%s388 + $0xe4] sm:$0xf] %v1966
        %2095 = vst [vmem:[%s388 + $0xe8] sm:$0xf] %v1967
        %2096 = vst [vmem:[%s388 + $0xec] sm:$0xf] %v1968
        %2097 = vst [vmem:[%s388 + $0xf0] sm:$0xf] %v1969
        %2098 = vst [vmem:[%s388 + $0xf4] sm:$0xf] %v1970
        %2099 = vst [vmem:[%s388 + $0xf8] sm:$0xf] %v1971
        %2100 = vst [vmem:[%s388 + $0xfc] sm:$0xf] %v1972
        %v2101 = vpack.c.bf16 %v1210, %v1207
        %v2102 = vpack.c.bf16 %v1218, %v1215
        %v2103 = vpack.c.bf16 %v1226, %v1223
        %v2104 = vpack.c.bf16 %v1234, %v1231
        %v2105 = vpack.c.bf16 %v1242, %v1239
        %v2106 = vpack.c.bf16 %v1250, %v1247
        %v2107 = vpack.c.bf16 %v1258, %v1255
        %v2108 = vpack.c.bf16 %v1266, %v1263
        %v2109 = vpack.c.bf16 %v1274, %v1271
        %v2110 = vpack.c.bf16 %v1282, %v1279
        %v2111 = vpack.c.bf16 %v1290, %v1287
        %v2112 = vpack.c.bf16 %v1298, %v1295
        %v2113 = vpack.c.bf16 %v1306, %v1303
        %v2114 = vpack.c.bf16 %v1314, %v1311
        %v2115 = vpack.c.bf16 %v1322, %v1319
        %v2116 = vpack.c.bf16 %v1330, %v1327
        %v2117 = vpack.c.bf16 %v1338, %v1335
        %v2118 = vpack.c.bf16 %v1346, %v1343
        %v2119 = vpack.c.bf16 %v1354, %v1351
        %v2120 = vpack.c.bf16 %v1362, %v1359
        %v2121 = vpack.c.bf16 %v1370, %v1367
        %v2122 = vpack.c.bf16 %v1378, %v1375
        %v2123 = vpack.c.bf16 %v1386, %v1383
        %v2124 = vpack.c.bf16 %v1394, %v1391
        %v2125 = vpack.c.bf16 %v1402, %v1399
        %v2126 = vpack.c.bf16 %v1410, %v1407
        %v2127 = vpack.c.bf16 %v1418, %v1415
        %v2128 = vpack.c.bf16 %v1426, %v1423
        %v2129 = vpack.c.bf16 %v1434, %v1431
        %v2130 = vpack.c.bf16 %v1442, %v1439
        %v2131 = vpack.c.bf16 %v1450, %v1447
        %v2132 = vpack.c.bf16 %v1458, %v1455
        %v2165 = vunpack.c.l.b16 %v2101
        %v2166 = vunpack.c.h.b16 %v2101
        %v2167 = vunpack.c.l.b16 %v2102
        %v2168 = vunpack.c.h.b16 %v2102
        %v2169 = vunpack.c.l.b16 %v2103
        %v2170 = vunpack.c.h.b16 %v2103
        %v2171 = vunpack.c.l.b16 %v2104
        %v2172 = vunpack.c.h.b16 %v2104
        %v2173 = vunpack.c.l.b16 %v2105
        %v2174 = vunpack.c.h.b16 %v2105
        %v2175 = vunpack.c.l.b16 %v2106
        %v2176 = vunpack.c.h.b16 %v2106
        %v2177 = vunpack.c.l.b16 %v2107
        %v2178 = vunpack.c.h.b16 %v2107
        %v2179 = vunpack.c.l.b16 %v2108
        %v2180 = vunpack.c.h.b16 %v2108
        %v2181 = vunpack.c.l.b16 %v2109
        %v2182 = vunpack.c.h.b16 %v2109
        %v2183 = vunpack.c.l.b16 %v2110
        %v2184 = vunpack.c.h.b16 %v2110
        %v2185 = vunpack.c.l.b16 %v2111
        %v2186 = vunpack.c.h.b16 %v2111
        %v2187 = vunpack.c.l.b16 %v2112
        %v2188 = vunpack.c.h.b16 %v2112
        %v2189 = vunpack.c.l.b16 %v2113
        %v2190 = vunpack.c.h.b16 %v2113
        %v2191 = vunpack.c.l.b16 %v2114
        %v2192 = vunpack.c.h.b16 %v2114
        %v2193 = vunpack.c.l.b16 %v2115
        %v2194 = vunpack.c.h.b16 %v2115
        %v2195 = vunpack.c.l.b16 %v2116
        %v2196 = vunpack.c.h.b16 %v2116
        %v2197 = vunpack.c.l.b16 %v2117
        %v2198 = vunpack.c.h.b16 %v2117
        %v2199 = vunpack.c.l.b16 %v2118
        %v2200 = vunpack.c.h.b16 %v2118
        %v2201 = vunpack.c.l.b16 %v2119
        %v2202 = vunpack.c.h.b16 %v2119
        %v2203 = vunpack.c.l.b16 %v2120
        %v2204 = vunpack.c.h.b16 %v2120
        %v2205 = vunpack.c.l.b16 %v2121
        %v2206 = vunpack.c.h.b16 %v2121
        %v2207 = vunpack.c.l.b16 %v2122
        %v2208 = vunpack.c.h.b16 %v2122
        %v2209 = vunpack.c.l.b16 %v2123
        %v2210 = vunpack.c.h.b16 %v2123
        %v2211 = vunpack.c.l.b16 %v2124
        %v2212 = vunpack.c.h.b16 %v2124
        %v2213 = vunpack.c.l.b16 %v2125
        %v2214 = vunpack.c.h.b16 %v2125
        %v2215 = vunpack.c.l.b16 %v2126
        %v2216 = vunpack.c.h.b16 %v2126
        %v2217 = vunpack.c.l.b16 %v2127
        %v2218 = vunpack.c.h.b16 %v2127
        %v2219 = vunpack.c.l.b16 %v2128
        %v2220 = vunpack.c.h.b16 %v2128
        %v2221 = vunpack.c.l.b16 %v2129
        %v2222 = vunpack.c.h.b16 %v2129
        %v2223 = vunpack.c.l.b16 %v2130
        %v2224 = vunpack.c.h.b16 %v2130
        %v2225 = vunpack.c.l.b16 %v2131
        %v2226 = vunpack.c.h.b16 %v2131
        %v2227 = vunpack.c.l.b16 %v2132
        %v2228 = vunpack.c.h.b16 %v2132
        %v2229 = vpack.c.b16 %v2165, %v2165
        %v2230 = vpack.c.b16 %v2166, %v2166
        %v2231 = vpack.c.b16 %v2167, %v2167
        %v2232 = vpack.c.b16 %v2168, %v2168
        %v2233 = vpack.c.b16 %v2169, %v2169
        %v2234 = vpack.c.b16 %v2170, %v2170
        %v2235 = vpack.c.b16 %v2171, %v2171
        %v2236 = vpack.c.b16 %v2172, %v2172
        %v2237 = vpack.c.b16 %v2173, %v2173
        %v2238 = vpack.c.b16 %v2174, %v2174
        %v2239 = vpack.c.b16 %v2175, %v2175
        %v2240 = vpack.c.b16 %v2176, %v2176
        %v2241 = vpack.c.b16 %v2177, %v2177
        %v2242 = vpack.c.b16 %v2178, %v2178
        %v2243 = vpack.c.b16 %v2179, %v2179
        %v2244 = vpack.c.b16 %v2180, %v2180
        %v2245 = vpack.c.b16 %v2181, %v2181
        %v2246 = vpack.c.b16 %v2182, %v2182
        %v2247 = vpack.c.b16 %v2183, %v2183
        %v2248 = vpack.c.b16 %v2184, %v2184
        %v2249 = vpack.c.b16 %v2185, %v2185
        %v2250 = vpack.c.b16 %v2186, %v2186
        %v2251 = vpack.c.b16 %v2187, %v2187
        %v2252 = vpack.c.b16 %v2188, %v2188
        %v2253 = vpack.c.b16 %v2189, %v2189
        %v2254 = vpack.c.b16 %v2190, %v2190
        %v2255 = vpack.c.b16 %v2191, %v2191
        %v2256 = vpack.c.b16 %v2192, %v2192
        %v2257 = vpack.c.b16 %v2193, %v2193
        %v2258 = vpack.c.b16 %v2194, %v2194
        %v2259 = vpack.c.b16 %v2195, %v2195
        %v2260 = vpack.c.b16 %v2196, %v2196
        %v2261 = vpack.c.b16 %v2197, %v2197
        %v2262 = vpack.c.b16 %v2198, %v2198
        %v2263 = vpack.c.b16 %v2199, %v2199
        %v2264 = vpack.c.b16 %v2200, %v2200
        %v2265 = vpack.c.b16 %v2201, %v2201
        %v2266 = vpack.c.b16 %v2202, %v2202
        %v2267 = vpack.c.b16 %v2203, %v2203
        %v2268 = vpack.c.b16 %v2204, %v2204
        %v2269 = vpack.c.b16 %v2205, %v2205
        %v2270 = vpack.c.b16 %v2206, %v2206
        %v2271 = vpack.c.b16 %v2207, %v2207
        %v2272 = vpack.c.b16 %v2208, %v2208
        %v2273 = vpack.c.b16 %v2209, %v2209
        %v2274 = vpack.c.b16 %v2210, %v2210
        %v2275 = vpack.c.b16 %v2211, %v2211
        %v2276 = vpack.c.b16 %v2212, %v2212
        %v2277 = vpack.c.b16 %v2213, %v2213
        %v2278 = vpack.c.b16 %v2214, %v2214
        %v2279 = vpack.c.b16 %v2215, %v2215
        %v2280 = vpack.c.b16 %v2216, %v2216
        %v2281 = vpack.c.b16 %v2217, %v2217
        %v2282 = vpack.c.b16 %v2218, %v2218
        %v2283 = vpack.c.b16 %v2219, %v2219
        %v2284 = vpack.c.b16 %v2220, %v2220
        %v2285 = vpack.c.b16 %v2221, %v2221
        %v2286 = vpack.c.b16 %v2222, %v2222
        %v2287 = vpack.c.b16 %v2223, %v2223
        %v2288 = vpack.c.b16 %v2224, %v2224
        %v2289 = vpack.c.b16 %v2225, %v2225
        %v2290 = vpack.c.b16 %v2226, %v2226
        %v2291 = vpack.c.b16 %v2227, %v2227
        %v2292 = vpack.c.b16 %v2228, %v2228
        %2357 = vst [vmem:[%s395] sm:$0xf] %v2229
        %2358 = vst [vmem:[%s395 + $0x4] sm:$0xf] %v2230
        %2359 = vst [vmem:[%s395 + $0x8] sm:$0xf] %v2231
        %2360 = vst [vmem:[%s395 + $0xc] sm:$0xf] %v2232
        %2361 = vst [vmem:[%s395 + $0x10] sm:$0xf] %v2233
        %2362 = vst [vmem:[%s395 + $0x14] sm:$0xf] %v2234
        %2363 = vst [vmem:[%s395 + $0x18] sm:$0xf] %v2235
        %2364 = vst [vmem:[%s395 + $0x1c] sm:$0xf] %v2236
        %2365 = vst [vmem:[%s395 + $0x20] sm:$0xf] %v2237
        %2366 = vst [vmem:[%s395 + $0x24] sm:$0xf] %v2238
        %2367 = vst [vmem:[%s395 + $0x28] sm:$0xf] %v2239
        %2368 = vst [vmem:[%s395 + $0x2c] sm:$0xf] %v2240
        %2369 = vst [vmem:[%s395 + $0x30] sm:$0xf] %v2241
        %2370 = vst [vmem:[%s395 + $0x34] sm:$0xf] %v2242
        %2371 = vst [vmem:[%s395 + $0x38] sm:$0xf] %v2243
        %2372 = vst [vmem:[%s395 + $0x3c] sm:$0xf] %v2244
        %2373 = vst [vmem:[%s395 + $0x40] sm:$0xf] %v2245
        %2374 = vst [vmem:[%s395 + $0x44] sm:$0xf] %v2246
        %2375 = vst [vmem:[%s395 + $0x48] sm:$0xf] %v2247
        %2376 = vst [vmem:[%s395 + $0x4c] sm:$0xf] %v2248
        %2377 = vst [vmem:[%s395 + $0x50] sm:$0xf] %v2249
        %2378 = vst [vmem:[%s395 + $0x54] sm:$0xf] %v2250
        %2379 = vst [vmem:[%s395 + $0x58] sm:$0xf] %v2251
        %2380 = vst [vmem:[%s395 + $0x5c] sm:$0xf] %v2252
        %2381 = vst [vmem:[%s395 + $0x60] sm:$0xf] %v2253
        %2382 = vst [vmem:[%s395 + $0x64] sm:$0xf] %v2254
        %2383 = vst [vmem:[%s395 + $0x68] sm:$0xf] %v2255
        %2384 = vst [vmem:[%s395 + $0x6c] sm:$0xf] %v2256
        %2385 = vst [vmem:[%s395 + $0x70] sm:$0xf] %v2257
        %2386 = vst [vmem:[%s395 + $0x74] sm:$0xf] %v2258
        %2387 = vst [vmem:[%s395 + $0x78] sm:$0xf] %v2259
        %2388 = vst [vmem:[%s395 + $0x7c] sm:$0xf] %v2260
        %2389 = vst [vmem:[%s395 + $0x80] sm:$0xf] %v2261
        %2390 = vst [vmem:[%s395 + $0x84] sm:$0xf] %v2262
        %2391 = vst [vmem:[%s395 + $0x88] sm:$0xf] %v2263
        %2392 = vst [vmem:[%s395 + $0x8c] sm:$0xf] %v2264
        %2393 = vst [vmem:[%s395 + $0x90] sm:$0xf] %v2265
        %2394 = vst [vmem:[%s395 + $0x94] sm:$0xf] %v2266
        %2395 = vst [vmem:[%s395 + $0x98] sm:$0xf] %v2267
        %2396 = vst [vmem:[%s395 + $0x9c] sm:$0xf] %v2268
        %2397 = vst [vmem:[%s395 + $0xa0] sm:$0xf] %v2269
        %2398 = vst [vmem:[%s395 + $0xa4] sm:$0xf] %v2270
        %2399 = vst [vmem:[%s395 + $0xa8] sm:$0xf] %v2271
        %2400 = vst [vmem:[%s395 + $0xac] sm:$0xf] %v2272
        %2401 = vst [vmem:[%s395 + $0xb0] sm:$0xf] %v2273
        %2402 = vst [vmem:[%s395 + $0xb4] sm:$0xf] %v2274
        %2403 = vst [vmem:[%s395 + $0xb8] sm:$0xf] %v2275
        %2404 = vst [vmem:[%s395 + $0xbc] sm:$0xf] %v2276
        %2405 = vst [vmem:[%s395 + $0xc0] sm:$0xf] %v2277
        %2406 = vst [vmem:[%s395 + $0xc4] sm:$0xf] %v2278
        %2407 = vst [vmem:[%s395 + $0xc8] sm:$0xf] %v2279
        %2408 = vst [vmem:[%s395 + $0xcc] sm:$0xf] %v2280
        %2409 = vst [vmem:[%s395 + $0xd0] sm:$0xf] %v2281
        %2410 = vst [vmem:[%s395 + $0xd4] sm:$0xf] %v2282
        %2411 = vst [vmem:[%s395 + $0xd8] sm:$0xf] %v2283
        %2412 = vst [vmem:[%s395 + $0xdc] sm:$0xf] %v2284
        %2413 = vst [vmem:[%s395 + $0xe0] sm:$0xf] %v2285
        %2414 = vst [vmem:[%s395 + $0xe4] sm:$0xf] %v2286
        %2415 = vst [vmem:[%s395 + $0xe8] sm:$0xf] %v2287
        %2416 = vst [vmem:[%s395 + $0xec] sm:$0xf] %v2288
        %2417 = vst [vmem:[%s395 + $0xf0] sm:$0xf] %v2289
        %2418 = vst [vmem:[%s395 + $0xf4] sm:$0xf] %v2290
        %2419 = vst [vmem:[%s395 + $0xf8] sm:$0xf] %v2291
        %2420 = vst [vmem:[%s395 + $0xfc] sm:$0xf] %v2292
        %s2421 = sand.u32 %s175, 1
        %s2422 = scalar_lea.sflag [#allocation4], %s2421
        %s2423 = sand.u32 %s175, 1
        %s2424 = smul.addr %s2423, 256
        %s2425 = scalar_lea.vmem [#allocation8], %s2424
        %s2426 = sand.u32 %s31, 1
        %s2427 = scalar_lea.sflag [#allocation10], %s2426
        %s2428 = sand.u32 %s203, 1
        %s2429 = smul.addr %s2428, 256
        %s2430 = scalar_lea.vmem [#allocation9], %s2429
        %s2431 = sand.u32 %s31, 1
        %s2432 = scalar_lea.sflag [#allocation10], %s2431
        %s2433 = sand.u32 %s231, 1
        %s2434 = smul.addr %s2433, 256
        %s2435 = scalar_lea.vmem [#allocation11], %s2434
        // Predicated region
        $region53: #{tpu_custom_call.1} parent=39 // pred_check
          %p2436 = pneg %p185
        $region54: #{tpu_custom_call.1} parent=39 // pred_check_branch
          %2438 = sbr.rel (%p2436) target = $region56
        $region55: #{tpu_custom_call.1} parent=39 // pred_region
          %s2439 = smul.u32 64, %s36
          %s2441 = ssub.s32 4096, 4096
          %2442 = vsyncadd %s2422, %s2441
          %s2443 = smul.addr %s35, 128
          %s2444 = sadd.s32 %s2439, %s2443
          %s2445 = smul.addr %s2444, 64
          %s2446 = scalar_lea.hbm %s5, %s2445
          %s2447 = sshll.u32 %s2425, 4
          %s2448 = int_to_ptr.vmem [resolvable:$true] %s2447
          %2453 = dma.vmem_to_hbm [thread:$0]  %s2448, 4096, %s2446, %s2422, 64, 64, 4
        $region56: #{tpu_custom_call.1} parent=39 // pred_fallthru
          _
        // Predicated region
        $region57: #{tpu_custom_call.1} parent=39 // pred_check
          %p2454 = pneg %p213
        $region58: #{tpu_custom_call.1} parent=39 // pred_check_branch
          %2456 = sbr.rel (%p2454) target = $region60
        $region59: #{tpu_custom_call.1} parent=39 // pred_region
          %s2457 = smul.u32 64, %s36
          %s2459 = ssub.s32 4096, 4096
          %2460 = vsyncadd %s2427, %s2459
          %s2461 = smul.addr %s35, 128
          %s2462 = sadd.s32 %s2457, %s2461
          %s2463 = smul.addr %s2462, 64
          %s2464 = scalar_lea.hbm %s6, %s2463
          %s2465 = sshll.u32 %s2430, 4
          %s2466 = int_to_ptr.vmem [resolvable:$true] %s2465
          %2471 = dma.vmem_to_hbm [thread:$0]  %s2466, 4096, %s2464, %s2427, 64, 64, 4
        $region60: #{tpu_custom_call.1} parent=39 // pred_fallthru
          _
        // Predicated region
        $region61: #{tpu_custom_call.1} parent=39 // pred_check
          %p2472 = pneg %p241
        $region62: #{tpu_custom_call.1} parent=39 // pred_check_branch
          %2474 = sbr.rel (%p2472) target = $region64
        $region63: #{tpu_custom_call.1} parent=39 // pred_region
          %s2475 = smul.u32 64, %s36
          %s2477 = ssub.s32 4096, 4096
          %2478 = vsyncadd %s2432, %s2477
          %s2479 = smul.addr %s35, 128
          %s2480 = sadd.s32 %s2475, %s2479
          %s2481 = smul.addr %s2480, 64
          %s2482 = scalar_lea.hbm %s7, %s2481
          %s2483 = sshll.u32 %s2435, 4
          %s2484 = int_to_ptr.vmem [resolvable:$true] %s2483
          %2489 = dma.vmem_to_hbm [thread:$0]  %s2484, 4096, %s2482, %s2432, 64, 64, 4
        $region64: #{tpu_custom_call.1} parent=39 // pred_fallthru
          _
      $region40: #{tpu_custom_call.1} parent=5 // pred_fallthru
        _
      %p2490 = scmp.le.s32.totalorder 2, %s26
      // Predicated region
      $region65: #{tpu_custom_call.1} parent=5 // pred_check
        %p2491 = pneg %p2490
      $region66: #{tpu_custom_call.1} parent=5 // pred_check_branch
        %2493 = sbr.rel (%p2491) target = $region68
      $region67: #{tpu_custom_call.1} parent=5 // pred_region
        %s2494 = ssub.s32 %s26, 2
        // Predicated region
        $region69: #{tpu_custom_call.1} parent=67 // pred_check
          %p2495 = pneg %p191
        $region70: #{tpu_custom_call.1} parent=67 // pred_check_branch
          %2497 = sbr.rel (%p2495) target = $region72
        $region71: #{tpu_custom_call.1} parent=67 // pred_region
          %s2498 = sand.u32 %s176, 1
          %s2499 = scalar_lea.sflag [#allocation4], %s2498
          %s2500 = sand.u32 %s176, 1
          %s2501 = smul.addr %s2500, 256
          %s2502 = scalar_lea.vmem [#allocation8], %s2501
          %2503 = dma.done %s2499, 4096
        $region72: #{tpu_custom_call.1} parent=67 // pred_fallthru
          _
        // Predicated region
        $region73: #{tpu_custom_call.1} parent=67 // pred_check
          %p2504 = pneg %p219
        $region74: #{tpu_custom_call.1} parent=67 // pred_check_branch
          %2506 = sbr.rel (%p2504) target = $region76
        $region75: #{tpu_custom_call.1} parent=67 // pred_region
          %s2507 = sand.u32 %s32, 1
          %s2508 = scalar_lea.sflag [#allocation10], %s2507
          %s2509 = sand.u32 %s204, 1
          %s2510 = smul.addr %s2509, 256
          %s2511 = scalar_lea.vmem [#allocation9], %s2510
          %2512 = dma.done %s2508, 4096
        $region76: #{tpu_custom_call.1} parent=67 // pred_fallthru
          _
        // Predicated region
        $region77: #{tpu_custom_call.1} parent=67 // pred_check
          %p2513 = pneg %p247
        $region78: #{tpu_custom_call.1} parent=67 // pred_check_branch
          %2515 = sbr.rel (%p2513) target = $region80
        $region79: #{tpu_custom_call.1} parent=67 // pred_region
          %s2516 = sand.u32 %s32, 1
          %s2517 = scalar_lea.sflag [#allocation10], %s2516
          %s2518 = sand.u32 %s232, 1
          %s2519 = smul.addr %s2518, 256
          %s2520 = scalar_lea.vmem [#allocation11], %s2519
          %2521 = dma.done %s2517, 4096
        $region80: #{tpu_custom_call.1} parent=67 // pred_fallthru
          _
      $region68: #{tpu_custom_call.1} parent=5 // pred_fallthru
        _
    $region6: #{tpu_custom_call.1} parent=1 // loop_footer
      %s30 = sadd.s32 1, %s26
    $region7: #{tpu_custom_call.1} parent=1 // loop_footer_branch
      %25 = sbr.rel target = $region3
    $region8: #{tpu_custom_call.1} parent=1 // loop_exit
      _
    %2522 = vsyncpa [#allocation3], 1
    %s2523 = scalar_lea.sflag [#allocation3], 1
    %2524 = vsyncpa %s2523, 1
    %2525 = vsyncpa [#allocation6], 1
    %s2526 = scalar_lea.sflag [#allocation6], 1
    %2527 = vsyncpa %s2526, 1
    %2528 = vsyncpa [#allocation4], 1
    %s2529 = scalar_lea.sflag [#allocation4], 1
    %2530 = vsyncpa %s2529, 1
    %2531 = vsyncpa [#allocation10], 1
    %s2532 = scalar_lea.sflag [#allocation10], 1
    %2533 = vsyncpa %s2532, 1

</llo_original>
